<compile_context>
chip_gen: v7x
topology: tpu7x:2x2x1
jax: 0.10.0
libtpu: 0.0.40
codegen_flags: <defaults>
</compile_context>

<pallas_src>
import jax
import jax.numpy as jnp
from jax.experimental import pallas as pl
from jax.experimental.pallas import tpu as pltpu

# Model geometry.
N, C, H, W = 2, 4, 16, 16
COUT, KH, KW = 8, 3, 3
K = C * KH * KW            # 36   (im2col contracting dim)
HW = H * W                 # 256  (lane-dense spatial dim)
NHW = N * HW               # 512
F_IN = COUT * HW           # 2048 (FC contracting dim)
NUM_CLASSES = 10
LANE = 128                 # class dim zero-padded to one full lane group


def _vmem():
    return pl.BlockSpec(memory_space=pltpu.MemorySpace.VMEM)


# ------------------------- fused forward Pallas kernel -------------------------

def _fused_fwd_kernel(patches_ref, w_ref, b_ref, fc_ref, fcb_ref,
                      logits_ref, act_ref):
    """conv(im2col matmul) + bias + ReLU + NCHW-flatten + FC, all in VMEM.

    patches_ref : (K, N*HW)        im2col patches, whole batch in the lane dim
    w_ref       : (COUT, K)        conv weight rows = output channel
    b_ref       : (COUT, 1)        conv bias
    fc_ref      : (COUT*HW, 128)   fc weight, classes zero-padded to 128 lanes
    fcb_ref     : (1, 128)         fc bias (padded)
    logits_ref  : (N, 128)         padded logits (unmasked lane-dense store)
    act_ref     : (N, COUT*HW)     NCHW-flattened post-ReLU activation (VJP residual)
    """
    n_batch, f_in = act_ref.shape
    cout = w_ref.shape[0]
    hw = f_in // cout

    # Conv for the whole batch as ONE MXU matmul: (COUT, K) @ (K, N*HW).
    a = jnp.dot(w_ref[...], patches_ref[...],
                preferred_element_type=jnp.float32)            # (COUT, N*HW)
    a = jnp.maximum(a + b_ref[...], 0.0)                       # bias + ReLU

    # NCHW flatten: 16 static, lane-aligned (1, HW) stores (N=2, COUT=8 unrolled).
    for n in range(n_batch):
        for c in range(cout):
            act_ref[n:n + 1, c * hw:(c + 1) * hw] = a[c:c + 1, n * hw:(n + 1) * hw]

    # FC for the whole batch as ONE lane-dense MXU matmul: (N, 2048) @ (2048, 128).
    logits_ref[...] = (jnp.dot(act_ref[...], fc_ref[...],
                               preferred_element_type=jnp.float32)
                       + fcb_ref[...]).astype(logits_ref.dtype)


def _fused_forward_pallas(patches, w_mat, conv_b, fc_pad, fcb_pad):
    return pl.pallas_call(
        _fused_fwd_kernel,
        out_shape=(jax.ShapeDtypeStruct((N, LANE), jnp.float32),
                   jax.ShapeDtypeStruct((N, F_IN), jnp.float32)),
        in_specs=[_vmem()] * 5,
        out_specs=(_vmem(), _vmem()),
    )(patches, w_mat, conv_b, fc_pad, fcb_pad)


# pallas_call does not support reverse-mode autodiff -> give the fused model a VJP.
@jax.custom_vjp
def fused_model(patches, w_mat, conv_b, fc_pad, fcb_pad):
    logits_pad, _ = _fused_forward_pallas(patches, w_mat, conv_b, fc_pad, fcb_pad)
    return logits_pad[:, :NUM_CLASSES]


def _fused_model_fwd(patches, w_mat, conv_b, fc_pad, fcb_pad):
    logits_pad, act2 = _fused_forward_pallas(patches, w_mat, conv_b, fc_pad, fcb_pad)
    return logits_pad[:, :NUM_CLASSES], (patches, w_mat, fc_pad, act2)


def _fused_model_bwd(res, dlogits):
    patches, w_mat, fc_pad, act2 = res
    fc10 = fc_pad[:, :NUM_CLASSES]                                   # (2048, 10)

    d_fcb = jnp.zeros((1, LANE), jnp.float32).at[0, :NUM_CLASSES].set(
        jnp.sum(dlogits, axis=0))
    d_fc = jnp.zeros((F_IN, LANE), jnp.float32).at[:, :NUM_CLASSES].set(
        act2.T @ dlogits)

    dact2 = dlogits @ fc10.T                                         # (N, 2048)
    dpre2 = dact2 * (act2 > 0.0).astype(dact2.dtype)                 # ReLU grad
    # Back to the conv-matmul layout (COUT, N*HW).
    dpre = dpre2.reshape(N, COUT, HW).transpose(1, 0, 2).reshape(COUT, NHW)

    d_convb = jnp.sum(dpre, axis=1, keepdims=True)                   # (COUT, 1)
    d_wmat = dpre @ patches.T                                        # (COUT, K)
    d_patches = w_mat.T @ dpre                                       # (K, N*HW)
    return d_patches, d_wmat, d_convb, d_fc, d_fcb


fused_model.defvjp(_fused_model_fwd, _fused_model_bwd)


# --------------------- gradient hook (register_hook equivalent) ----------------

@jax.custom_vjp
def clip_grad_hook(image, mask4):
    # Forward: identity (the PyTorch hook only affects backward).
    return image


def _clip_grad_hook_fwd(image, mask4):
    return image, mask4


def _clip_grad_hook_bwd(mask4, g):
    # Equivalent of WrapperModel.clip_grad: grad * bitmask.unsqueeze(0).
    # Per perf review this is a plain fused XLA multiply (the previous standalone
    # Pallas launch cost ~1 extra kernel launch + HBM round trip for ns of VPU work).
    # TODO(synk): the PyTorch hook also prints 'Clipping gradient of input'; side-effect
    # printing inside a traced backward is intentionally omitted.
    return g * mask4, jnp.zeros_like(mask4)


clip_grad_hook.defvjp(_clip_grad_hook_fwd, _clip_grad_hook_bwd)


# --------------------------------- model glue -----------------------------------

def im2col_3x3_pad1(x):
    """(N, C, H, W) -> (C*9, N*H*W), K ordered (c, ki, kj) to match conv_w.reshape."""
    n, c, h, w = x.shape
    xt = jnp.transpose(x, (1, 0, 2, 3))                      # (C, N, H, W)
    xp = jnp.pad(xt, ((0, 0), (0, 0), (1, 1), (1, 1)))
    taps = [xp[:, :, di:di + h, dj:dj + w] for di in range(3) for dj in range(3)]
    pat = jnp.stack(taps, axis=1)                            # (C, 9, N, H, W)
    return pat.reshape(c * 9, n * h * w)                     # (K, N*HW)


def make_grad_bitmask(image_dim, corner, sub_dim):
    """torch.zeros(image_dim); mask[x:x+w, y:y+h] = 1"""
    cx, cy = corner
    sw, sh = sub_dim
    mask = jnp.zeros(image_dim, dtype=jnp.float32)
    mask = mask.at[cx:cx + sw, cy:cy + sh].set(1.0)
    return mask


def init_params(key):
    k1, k2, k3, k4 = jax.random.split(key, 4)
    conv_w = 0.05 * jax.random.normal(k1, (COUT, C, KH, KW), jnp.float32)
    conv_b = 0.05 * jax.random.normal(k2, (COUT,), jnp.float32)
    fc_w = 0.05 * jax.random.normal(k3, (F_IN, NUM_CLASSES), jnp.float32)
    fc_b = 0.05 * jax.random.normal(k4, (NUM_CLASSES,), jnp.float32)
    return dict(conv_w=conv_w, conv_b=conv_b, fc_w=fc_w, fc_b=fc_b)


def prepare_params(params):
    """One-time relayout of the weights for the fused kernel.  The FC weight keeps its
    native NCHW-flatten row order (COUT*HW, NUM_CLASSES) and is zero-padded once to a
    lane-dense (2048, 128) RHS so the in-kernel FC is a single dense matmul."""
    fc_pad = jnp.zeros((F_IN, LANE), jnp.float32).at[:, :NUM_CLASSES].set(params["fc_w"])
    fcb_pad = jnp.zeros((1, LANE), jnp.float32).at[0, :NUM_CLASSES].set(params["fc_b"])
    return dict(
        w_mat=params["conv_w"].reshape(COUT, K),              # (COUT, C*9)
        conv_b=params["conv_b"].reshape(COUT, 1),
        fc_pad=fc_pad,                                        # (2048, 128)
        fcb_pad=fcb_pad,                                      # (1, 128)
    )


def inner_model_forward(prepped, image):
    """Conv3x3(pad=1) -> ReLU -> Flatten(NCHW) -> Linear, fused in one Pallas kernel."""
    # TODO(synk): im2col stays a pure-JAX/XLA fusion in front of the kernel; fold it
    # in-kernel (pltpu.roll taps) only if profiling shows this fusion on the wall clock.
    patches = im2col_3x3_pad1(image)
    return fused_model(patches, prepped["w_mat"], prepped["conv_b"],
                       prepped["fc_pad"], prepped["fcb_pad"])


def wrapper_model_forward(prepped, mask4, image):
    image = clip_grad_hook(image, mask4)       # register_hook equivalent
    return inner_model_forward(prepped, image)


def reference_forward(params, image):
    """Plain-XLA reference of the inner model (for self-checking)."""
    y = jax.lax.conv_general_dilated(
        image, params["conv_w"], window_strides=(1, 1), padding=((1, 1), (1, 1)),
        dimension_numbers=("NCHW", "OIHW", "NCHW"),
        precision=jax.lax.Precision.HIGHEST)
    y = jax.nn.relu(y + params["conv_b"][None, :, None, None])
    y = y.reshape(image.shape[0], -1)
    return jnp.dot(y, params["fc_w"], precision=jax.lax.Precision.HIGHEST) + params["fc_b"]


# ------------------------------------- main --------------------------------------

if __name__ == "__main__":
    key = jax.random.PRNGKey(0)
    k_img, k_par = jax.random.split(key)

    image = jax.random.normal(k_img, (N, C, H, W), jnp.float32)
    params = init_params(k_par)
    prepped = prepare_params(params)

    # Bitmask built once; broadcast shape (1, 1, H, W) for the backward hook.
    mask_hw = make_grad_bitmask((H, W), corner=(4, 5), sub_dim=(6, 7))
    mask4 = mask_hw[None, None, :, :]

    # Forward.
    fwd = jax.jit(wrapper_model_forward)
    logits = fwd(prepped, mask4, image)
    jax.block_until_ready(logits)
    assert logits.shape == (N, NUM_CLASSES)

    # Numerical check vs plain-XLA reference of the same model.
    ref_logits = reference_forward(params, image)
    assert jnp.allclose(logits, ref_logits, atol=5e-3, rtol=5e-3), "forward mismatch"

    # Backward: exercises the gradient-clipping hook + custom VJP of the fused kernel.
    def loss_fn(img):
        return jnp.sum(wrapper_model_forward(prepped, mask4, img))

    g = jax.jit(jax.grad(loss_fn))(image)
    jax.block_until_ready(g)
    assert g.shape == image.shape

    # Hook semantics: gradient is exactly zero outside the sub-image window,
    # and equals the (masked) reference gradient inside it.
    outside = (1.0 - mask_hw)[None, None, :, :]
    assert bool(jnp.all(g * outside == 0.0))
    ref_g = jax.grad(lambda img: jnp.sum(reference_forward(params, img)))(image) * mask4
    assert jnp.allclose(g, ref_g, atol=5e-3, rtol=5e-3), "backward mismatch"

    print("KERNEL_OK")
</pallas_src>

<mosaic_0001>
module attributes {stable_mosaic.version = 11 : i64} {
  func.func @_fused_fwd_kernel(%arg0: memref<36x512xf32, #tpu.memory_space<vmem>>, %arg1: memref<8x36xf32, #tpu.memory_space<vmem>>, %arg2: memref<8x1xf32, #tpu.memory_space<vmem>>, %arg3: memref<2048x128xf32, #tpu.memory_space<vmem>>, %arg4: memref<1x128xf32, #tpu.memory_space<vmem>>, %arg5: memref<2x128xf32, #tpu.memory_space<vmem>>, %arg6: memref<2x2048xf32, #tpu.memory_space<vmem>>) attributes {dimension_semantics = [], scalar_prefetch = 0 : i64, scratch_operands = 0 : i64, tpu.core_type = #tpu.core_type<tc>} {
    %c0 = arith.constant 0 : index
    %c0_0 = arith.constant 0 : index
    %0 = vector.load %arg1[%c0, %c0_0] : memref<8x36xf32, #tpu.memory_space<vmem>>, vector<8x36xf32>
    %c0_1 = arith.constant 0 : index
    %c0_2 = arith.constant 0 : index
    %1 = vector.load %arg0[%c0_1, %c0_2] : memref<36x512xf32, #tpu.memory_space<vmem>>, vector<36x512xf32>
    %cst = arith.constant dense<0.000000e+00> : vector<8x512xf32>
    %2 = tpu.matmul %0, %1, %cst {dimension_numbers = #tpu.dot_dimension_numbers<[1], [0], [0], [1], [0, 0, 1, 1], [], []>} : vector<8x36xf32>, vector<36x512xf32>, vector<8x512xf32> -> vector<8x512xf32>
    %c0_3 = arith.constant 0 : index
    %c0_4 = arith.constant 0 : index
    %3 = vector.load %arg2[%c0_3, %c0_4] : memref<8x1xf32, #tpu.memory_space<vmem>>, vector<8x1xf32>
    %4 = vector.broadcast %3 : vector<8x1xf32> to vector<8x512xf32>
    %5 = arith.addf %2, %4 : vector<8x512xf32>
    %cst_5 = arith.constant 0.000000e+00 : f32
    %6 = vector.broadcast %cst_5 : f32 to vector<8x512xf32>
    %7 = arith.maximumf %5, %6 : vector<8x512xf32>
    %8 = vector.extract_strided_slice %7 {offsets = [0, 0], sizes = [1, 256], strides = [1, 1]} : vector<8x512xf32> to vector<1x256xf32>
    %c0_6 = arith.constant 0 : index
    %c0_7 = arith.constant 0 : index
    %9 = vector.load %arg6[%c0_6, %c0_7] : memref<2x2048xf32, #tpu.memory_space<vmem>>, vector<1x256xf32>
    tpu.vector_store %arg6[%c0_6, %c0_7], %8 {strides = array<i32>} : memref<2x2048xf32, #tpu.memory_space<vmem>>, vector<1x256xf32>,
    %10 = vector.extract_strided_slice %7 {offsets = [1, 0], sizes = [1, 256], strides = [1, 1]} : vector<8x512xf32> to vector<1x256xf32>
    %c0_8 = arith.constant 0 : index
    %c256 = arith.constant 256 : index
    %11 = vector.load %arg6[%c0_8, %c256] : memref<2x2048xf32, #tpu.memory_space<vmem>>, vector<1x256xf32>
    tpu.vector_store %arg6[%c0_8, %c256], %10 {strides = array<i32>} : memref<2x2048xf32, #tpu.memory_space<vmem>>, vector<1x256xf32>,
    %12 = vector.extract_strided_slice %7 {offsets = [2, 0], sizes = [1, 256], strides = [1, 1]} : vector<8x512xf32> to vector<1x256xf32>
    %c0_9 = arith.constant 0 : index
    %c512 = arith.constant 512 : index
    %13 = vector.load %arg6[%c0_9, %c512] : memref<2x2048xf32, #tpu.memory_space<vmem>>, vector<1x256xf32>
    tpu.vector_store %arg6[%c0_9, %c512], %12 {strides = array<i32>} : memref<2x2048xf32, #tpu.memory_space<vmem>>, vector<1x256xf32>,
    %14 = vector.extract_strided_slice %7 {offsets = [3, 0], sizes = [1, 256], strides = [1, 1]} : vector<8x512xf32> to vector<1x256xf32>
    %c0_10 = arith.constant 0 : index
    %c768 = arith.constant 768 : index
    %15 = vector.load %arg6[%c0_10, %c768] : memref<2x2048xf32, #tpu.memory_space<vmem>>, vector<1x256xf32>
    tpu.vector_store %arg6[%c0_10, %c768], %14 {strides = array<i32>} : memref<2x2048xf32, #tpu.memory_space<vmem>>, vector<1x256xf32>,
    %16 = vector.extract_strided_slice %7 {offsets = [4, 0], sizes = [1, 256], strides = [1, 1]} : vector<8x512xf32> to vector<1x256xf32>
    %c0_11 = arith.constant 0 : index
    %c1024 = arith.constant 1024 : index
    %17 = vector.load %arg6[%c0_11, %c1024] : memref<2x2048xf32, #tpu.memory_space<vmem>>, vector<1x256xf32>
    tpu.vector_store %arg6[%c0_11, %c1024], %16 {strides = array<i32>} : memref<2x2048xf32, #tpu.memory_space<vmem>>, vector<1x256xf32>,
    %18 = vector.extract_strided_slice %7 {offsets = [5, 0], sizes = [1, 256], strides = [1, 1]} : vector<8x512xf32> to vector<1x256xf32>
    %c0_12 = arith.constant 0 : index
    %c1280 = arith.constant 1280 : index
    %19 = vector.load %arg6[%c0_12, %c1280] : memref<2x2048xf32, #tpu.memory_space<vmem>>, vector<1x256xf32>
    tpu.vector_store %arg6[%c0_12, %c1280], %18 {strides = array<i32>} : memref<2x2048xf32, #tpu.memory_space<vmem>>, vector<1x256xf32>,
    %20 = vector.extract_strided_slice %7 {offsets = [6, 0], sizes = [1, 256], strides = [1, 1]} : vector<8x512xf32> to vector<1x256xf32>
    %c0_13 = arith.constant 0 : index
    %c1536 = arith.constant 1536 : index
    %21 = vector.load %arg6[%c0_13, %c1536] : memref<2x2048xf32, #tpu.memory_space<vmem>>, vector<1x256xf32>
    tpu.vector_store %arg6[%c0_13, %c1536], %20 {strides = array<i32>} : memref<2x2048xf32, #tpu.memory_space<vmem>>, vector<1x256xf32>,
    %22 = vector.extract_strided_slice %7 {offsets = [7, 0], sizes = [1, 256], strides = [1, 1]} : vector<8x512xf32> to vector<1x256xf32>
    %c0_14 = arith.constant 0 : index
    %c1792 = arith.constant 1792 : index
    %23 = vector.load %arg6[%c0_14, %c1792] : memref<2x2048xf32, #tpu.memory_space<vmem>>, vector<1x256xf32>
    tpu.vector_store %arg6[%c0_14, %c1792], %22 {strides = array<i32>} : memref<2x2048xf32, #tpu.memory_space<vmem>>, vector<1x256xf32>,
    %24 = vector.extract_strided_slice %7 {offsets = [0, 256], sizes = [1, 256], strides = [1, 1]} : vector<8x512xf32> to vector<1x256xf32>
    %c1 = arith.constant 1 : index
    %c0_15 = arith.constant 0 : index
    %25 = vector.load %arg6[%c1, %c0_15] : memref<2x2048xf32, #tpu.memory_space<vmem>>, vector<1x256xf32>
    tpu.vector_store %arg6[%c1, %c0_15], %24 {strides = array<i32>} : memref<2x2048xf32, #tpu.memory_space<vmem>>, vector<1x256xf32>,
    %26 = vector.extract_strided_slice %7 {offsets = [1, 256], sizes = [1, 256], strides = [1, 1]} : vector<8x512xf32> to vector<1x256xf32>
    %c1_16 = arith.constant 1 : index
    %c256_17 = arith.constant 256 : index
    %27 = vector.load %arg6[%c1_16, %c256_17] : memref<2x2048xf32, #tpu.memory_space<vmem>>, vector<1x256xf32>
    tpu.vector_store %arg6[%c1_16, %c256_17], %26 {strides = array<i32>} : memref<2x2048xf32, #tpu.memory_space<vmem>>, vector<1x256xf32>,
    %28 = vector.extract_strided_slice %7 {offsets = [2, 256], sizes = [1, 256], strides = [1, 1]} : vector<8x512xf32> to vector<1x256xf32>
    %c1_18 = arith.constant 1 : index
    %c512_19 = arith.constant 512 : index
    %29 = vector.load %arg6[%c1_18, %c512_19] : memref<2x2048xf32, #tpu.memory_space<vmem>>, vector<1x256xf32>
    tpu.vector_store %arg6[%c1_18, %c512_19], %28 {strides = array<i32>} : memref<2x2048xf32, #tpu.memory_space<vmem>>, vector<1x256xf32>,
    %30 = vector.extract_strided_slice %7 {offsets = [3, 256], sizes = [1, 256], strides = [1, 1]} : vector<8x512xf32> to vector<1x256xf32>
    %c1_20 = arith.constant 1 : index
    %c768_21 = arith.constant 768 : index
    %31 = vector.load %arg6[%c1_20, %c768_21] : memref<2x2048xf32, #tpu.memory_space<vmem>>, vector<1x256xf32>
    tpu.vector_store %arg6[%c1_20, %c768_21], %30 {strides = array<i32>} : memref<2x2048xf32, #tpu.memory_space<vmem>>, vector<1x256xf32>,
    %32 = vector.extract_strided_slice %7 {offsets = [4, 256], sizes = [1, 256], strides = [1, 1]} : vector<8x512xf32> to vector<1x256xf32>
    %c1_22 = arith.constant 1 : index
    %c1024_23 = arith.constant 1024 : index
    %33 = vector.load %arg6[%c1_22, %c1024_23] : memref<2x2048xf32, #tpu.memory_space<vmem>>, vector<1x256xf32>
    tpu.vector_store %arg6[%c1_22, %c1024_23], %32 {strides = array<i32>} : memref<2x2048xf32, #tpu.memory_space<vmem>>, vector<1x256xf32>,
    %34 = vector.extract_strided_slice %7 {offsets = [5, 256], sizes = [1, 256], strides = [1, 1]} : vector<8x512xf32> to vector<1x256xf32>
    %c1_24 = arith.constant 1 : index
    %c1280_25 = arith.constant 1280 : index
    %35 = vector.load %arg6[%c1_24, %c1280_25] : memref<2x2048xf32, #tpu.memory_space<vmem>>, vector<1x256xf32>
    tpu.vector_store %arg6[%c1_24, %c1280_25], %34 {strides = array<i32>} : memref<2x2048xf32, #tpu.memory_space<vmem>>, vector<1x256xf32>,
    %36 = vector.extract_strided_slice %7 {offsets = [6, 256], sizes = [1, 256], strides = [1, 1]} : vector<8x512xf32> to vector<1x256xf32>
    %c1_26 = arith.constant 1 : index
    %c1536_27 = arith.constant 1536 : index
    %37 = vector.load %arg6[%c1_26, %c1536_27] : memref<2x2048xf32, #tpu.memory_space<vmem>>, vector<1x256xf32>
    tpu.vector_store %arg6[%c1_26, %c1536_27], %36 {strides = array<i32>} : memref<2x2048xf32, #tpu.memory_space<vmem>>, vector<1x256xf32>,
    %38 = vector.extract_strided_slice %7 {offsets = [7, 256], sizes = [1, 256], strides = [1, 1]} : vector<8x512xf32> to vector<1x256xf32>
    %c1_28 = arith.constant 1 : index
    %c1792_29 = arith.constant 1792 : index
    %39 = vector.load %arg6[%c1_28, %c1792_29] : memref<2x2048xf32, #tpu.memory_space<vmem>>, vector<1x256xf32>
    tpu.vector_store %arg6[%c1_28, %c1792_29], %38 {strides = array<i32>} : memref<2x2048xf32, #tpu.memory_space<vmem>>, vector<1x256xf32>,
    %c0_30 = arith.constant 0 : index
    %c0_31 = arith.constant 0 : index
    %40 = vector.load %arg6[%c0_30, %c0_31] : memref<2x2048xf32, #tpu.memory_space<vmem>>, vector<2x2048xf32>
    %c0_32 = arith.constant 0 : index
    %c0_33 = arith.constant 0 : index
    %41 = vector.load %arg3[%c0_32, %c0_33] : memref<2048x128xf32, #tpu.memory_space<vmem>>, vector<2048x128xf32>
    %cst_34 = arith.constant dense<0.000000e+00> : vector<2x128xf32>
    %42 = tpu.matmul %40, %41, %cst_34 {dimension_numbers = #tpu.dot_dimension_numbers<[1], [0], [0], [1], [0, 0, 1, 1], [], []>} : vector<2x2048xf32>, vector<2048x128xf32>, vector<2x128xf32> -> vector<2x128xf32>
    %c0_35 = arith.constant 0 : index
    %c0_36 = arith.constant 0 : index
    %43 = vector.load %arg4[%c0_35, %c0_36] : memref<1x128xf32, #tpu.memory_space<vmem>>, vector<1x128xf32>
    %44 = vector.broadcast %43 : vector<1x128xf32> to vector<2x128xf32>
    %45 = arith.addf %42, %44 : vector<2x128xf32>
    %c0_37 = arith.constant 0 : index
    %c0_38 = arith.constant 0 : index
    %46 = vector.load %arg5[%c0_37, %c0_38] : memref<2x128xf32, #tpu.memory_space<vmem>>, vector<2x128xf32>
    tpu.vector_store %arg5[%c0_37, %c0_38], %45 {strides = array<i32>} : memref<2x128xf32, #tpu.memory_space<vmem>>, vector<2x128xf32>,
    return
  }
}

</mosaic_0001>

<llo_original>
// kernel: wrapper_model_forward.1
$region0: #{wrapper_model_forward.1}
  #allocation0 [shape = 'u32[]', space=smem, size = 0x4, offset = 0x4, fixed_abs, tag = 'smem constant byte address 0x4 - core index']
  #allocation1 [shape = 'u32[144,128]{1,0:T(1,128)}', space=vmem, size = 0x12000, scoped, tag = 'internal scratch']
  %s0 = inlined_call_operand.vmem [shape: f32[36,512], index: 0, kind: input, shape index: {}]
  %s1 = inlined_call_operand.vmem [shape: f32[8,36], index: 1, kind: input, shape index: {}]
  %s2 = inlined_call_operand.vmem [shape: f32[8,1], index: 2, kind: input, shape index: {}]
  %s3 = inlined_call_operand.vmem [shape: f32[2048,128], index: 3, kind: input, shape index: {}]
  %s4 = inlined_call_operand.vmem [shape: f32[1,128], index: 4, kind: input, shape index: {}]
  %s5 = inlined_call_operand.hbm [shape: f32[2,128], index: 5, kind: output, shape index: {0}]
  %s6 = inlined_call_operand.hbm [shape: f32[2,2048], index: 6, kind: output, shape index: {1}]
  %7 = xla_tuple %s5, %s6
  %s8 = sld [smem:[#allocation0]]
  $region38: #{wrapper_model_forward.1} parent=0
    _
  %s10 = ssub.s32 1, %s8
  %s11 = scalar_select 0, %s10, %s8
  $region1: #{wrapper_model_forward.1} parent=0
    #allocation2 [shape = 'u8[1024]{0}', space=vmem, size = 0x400, scoped, tag = 'output window, operand 0, single buffered']
    #allocation3 [shape = 's32[1]{0}', space=sflag, size = 0x4, scoped, tag = 'scoped memory for wrapper_model_forward.1']
    #allocation4 [shape = 'u8[16384]{0}', space=vmem, size = 0x4000, scoped, tag = 'output window, operand 1, single buffered']
    #allocation5 [shape = 's32[1]{0}', space=sflag, size = 0x4, scoped, tag = 'scoped memory for wrapper_model_forward.1']
    %12 = vsyncpa [#allocation3], 0
    %13 = vsyncpa [#allocation5], 0
    // Predicated region
    $region2: #{wrapper_model_forward.1} parent=1 // pred_check
      _
    $region3: #{wrapper_model_forward.1} parent=1 // pred_check_branch
      %15 = sbr.rel (0) target = $region5
    $region4: #{wrapper_model_forward.1} parent=1 // pred_region
      _
    $region5: #{wrapper_model_forward.1} parent=1 // pred_fallthru
      _
    // Predicated region
    $region6: #{wrapper_model_forward.1} parent=1 // pred_check
      _
    $region7: #{wrapper_model_forward.1} parent=1 // pred_check_branch
      %17 = sbr.rel (0) target = $region9
    $region8: #{wrapper_model_forward.1} parent=1 // pred_region
      _
    $region9: #{wrapper_model_forward.1} parent=1 // pred_fallthru
      _
    // Predicated region
    $region10: #{wrapper_model_forward.1} parent=1 // pred_check
      _
    $region11: #{wrapper_model_forward.1} parent=1 // pred_check_branch
      %19 = sbr.rel (0) target = $region13
    $region12: #{wrapper_model_forward.1} parent=1 // pred_region
      _
    $region13: #{wrapper_model_forward.1} parent=1 // pred_fallthru
      _
    // Predicated region
    $region14: #{wrapper_model_forward.1} parent=1 // pred_check
      _
    $region15: #{wrapper_model_forward.1} parent=1 // pred_check_branch
      %21 = sbr.rel (0) target = $region17
    $region16: #{wrapper_model_forward.1} parent=1 // pred_region
      _
    $region17: #{wrapper_model_forward.1} parent=1 // pred_fallthru
      _
    // Predicated region
    $region18: #{wrapper_model_forward.1} parent=1 // pred_check
      _
    $region19: #{wrapper_model_forward.1} parent=1 // pred_check_branch
      %23 = sbr.rel (0) target = $region21
    $region20: #{wrapper_model_forward.1} parent=1 // pred_region
      _
    $region21: #{wrapper_model_forward.1} parent=1 // pred_fallthru
      _
    %v24 = vld [vmem:[%s1] sm:$0xff]
    %v25 = vld [vmem:[%s0] sm:$0xff]
    %v26 = vld [vmem:[%s0 + $0x8] sm:$0xff]
    %v27 = vld [vmem:[%s0 + $0x10] sm:$0xff]
    %v28 = vld [vmem:[%s0 + $0x18] sm:$0xff]
    %v29 = vld [vmem:[%s0 + $0x20] sm:$0xff]
    %v30 = vld [vmem:[%s0 + $0x28] sm:$0xff]
    %v31 = vld [vmem:[%s0 + $0x30] sm:$0xff]
    %v32 = vld [vmem:[%s0 + $0x38] sm:$0xff]
    %v33 = vld [vmem:[%s0 + $0x40] sm:$0xff]
    %v34 = vld [vmem:[%s0 + $0x48] sm:$0xff]
    %v35 = vld [vmem:[%s0 + $0x50] sm:$0xff]
    %v36 = vld [vmem:[%s0 + $0x58] sm:$0xff]
    %v37 = vld [vmem:[%s0 + $0x60] sm:$0xff]
    %v38 = vld [vmem:[%s0 + $0x68] sm:$0xff]
    %v39 = vld [vmem:[%s0 + $0x70] sm:$0xff]
    %v40 = vld [vmem:[%s0 + $0x78] sm:$0xff]
    %v41 = vld [vmem:[%s0 + $0x80] sm:$0xf]
    %v42 = vld [vmem:[%s0 + $0x88] sm:$0xf]
    %v43 = vld [vmem:[%s0 + $0x90] sm:$0xf]
    %v44 = vld [vmem:[%s0 + $0x98] sm:$0xf]
    %v45 = vld [vmem:[%s2] sm:$0xff]
    %47 = vset.pattern.permute.xlu0 0
    %48 = vperm.xlu0 %47, %v45
    %v49 = vpop.permute.xlu0 %48
    %vm51 = vcmask 293888
    %v53 = vsel %vm51, %v24, 0
    %vm55 = vcmask 1043456
    %v57 = vsel %vm55, %v41, 0
    %v60 = vsel %vm55, %v42, 0
    %v63 = vsel %vm55, %v43, 0
    %v66 = vsel %vm55, %v44, 0
    %68 = vmatprep.subr.mxu0 %v26
    %69 = vmatpush1.msra.mxu0 %v25
    %70 = vmatprep.subr.mxu0 %v30
    %71 = vmatpush1.msra.mxu0 %v29
    %72 = vmatprep.subr.mxu0 %v34
    %73 = vmatpush1.msra.mxu0 %v33
    %74 = vmatprep.subr.mxu0 %v38
    %75 = vmatpush1.msra.mxu0 %v37
    %76 = vmatprep.subr.mxu0 %v60
    %77 = vmatpush1.msra.mxu0 %v57
    %78 = vmatprep.subr.mxu0 0.0
    %79 = vmatpush1.msra.mxu0 0.0
    %80 = vmatprep.subr.mxu0 0.0
    %81 = vmatpush1.msra.mxu0 0.0
    %82 = vmatprep.subr.mxu0 0.0
    %83 = vmatpush1.msra.mxu0 0.0
    %84 = vmatprep.subr.mxu0 0.0
    %85 = vmatpush1.msra.mxu0 0.0
    %86 = vmatprep.subr.mxu0 0.0
    %87 = vmatpush1.msra.mxu0 0.0
    %88 = vmatprep.subr.mxu0 0.0
    %89 = vmatpush1.msra.mxu0 0.0
    %90 = vmatprep.subr.mxu0 0.0
    %91 = vmatpush1.msra.mxu0 0.0
    %92 = vmatprep.subr.mxu0 0.0
    %93 = vmatpush1.msra.mxu0 0.0
    %94 = vmatprep.subr.mxu0 0.0
    %95 = vmatpush1.msra.mxu0 0.0
    %96 = vmatprep.subr.mxu0 0.0
    %97 = vmatpush1.msra.mxu0 0.0
    %98 = vmatprep.subr.mxu0 0.0
    %99 = vmatpush1.msra.mxu0 0.0
    %100 = vmatprep.subr.mxu0 0.0
    %101 = vmatpush1.msra.mxu0 0.0
    %102 = vmatprep.subr.mxu0 0.0
    %103 = vmatpush1.msra.mxu0 0.0
    %104 = vmatprep.subr.mxu0 0.0
    %105 = vmatpush1.msra.mxu0 0.0
    %106 = vmatprep.subr.mxu0 0.0
    %107 = vmatpush1.msra.mxu0 0.0
    %108 = vmatprep.subr.mxu0 0.0
    %109 = vmatpush1.msra.mxu0 0.0
    %110 = vmatprep.subr.mxu0 0.0
    %111 = vmatpush1.msra.mxu0 0.0
    %112 = vmatprep.subr.mxu0 0.0
    %113 = vmatpush1.msra.mxu0 0.0
    %114 = vmatprep.subr.mxu0 0.0
    %115 = vmatpush1.msra.mxu0 0.0
    %116 = vmatprep.subr.mxu0 0.0
    %117 = vmatpush1.msra.mxu0 0.0
    %118 = vmatprep.subr.mxu0 0.0
    %119 = vmatpush1.msra.mxu0 0.0
    %120 = vmatprep.subr.mxu0 0.0
    %121 = vmatpush1.msra.mxu0 0.0
    %122 = vmatprep.subr.mxu0 0.0
    %123 = vmatpush1.msra.mxu0 0.0
    %124 = vmatprep.subr.mxu0 0.0
    %125 = vmatpush1.msra.mxu0 0.0
    %126 = vmatprep.subr.mxu0 0.0
    %127 = vmatpush1.msra.mxu0 0.0
    %128 = vmatprep.subr.mxu0 0.0
    %129 = vmatpush1.msra.mxu0 0.0
    %130 = vmatprep.subr.mxu0 0.0
    %131 = vmatpush1.msra.mxu0 0.0
    %132 = vmatprep.mubr.f32.mxu0 0.0
    %133 = vmatmul.mubr.f32.gmra.mrb[0].mxu0 %v53
    %v134 = vpop.f32.mrb[0].mxu0
    %v135 = vadd.f32 %v49, %v134
    %v136 = vpop.f32.mrb[0].mxu0
    %v137 = vadd.f32 %v49, %v136
    %138 = vdwg.mxu0
    %139 = vmatprep.subr.mxu0 %v28
    %140 = vmatpush1.msra.mxu0 %v27
    %141 = vmatprep.subr.mxu0 %v32
    %142 = vmatpush1.msra.mxu0 %v31
    %143 = vmatprep.subr.mxu0 %v36
    %144 = vmatpush1.msra.mxu0 %v35
    %145 = vmatprep.subr.mxu0 %v40
    %146 = vmatpush1.msra.mxu0 %v39
    %147 = vmatprep.subr.mxu0 %v66
    %148 = vmatpush1.msra.mxu0 %v63
    %149 = vmatprep.subr.mxu0 0.0
    %150 = vmatpush1.msra.mxu0 0.0
    %151 = vmatprep.subr.mxu0 0.0
    %152 = vmatpush1.msra.mxu0 0.0
    %153 = vmatprep.subr.mxu0 0.0
    %154 = vmatpush1.msra.mxu0 0.0
    %155 = vmatprep.subr.mxu0 0.0
    %156 = vmatpush1.msra.mxu0 0.0
    %157 = vmatprep.subr.mxu0 0.0
    %158 = vmatpush1.msra.mxu0 0.0
    %159 = vmatprep.subr.mxu0 0.0
    %160 = vmatpush1.msra.mxu0 0.0
    %161 = vmatprep.subr.mxu0 0.0
    %162 = vmatpush1.msra.mxu0 0.0
    %163 = vmatprep.subr.mxu0 0.0
    %164 = vmatpush1.msra.mxu0 0.0
    %165 = vmatprep.subr.mxu0 0.0
    %166 = vmatpush1.msra.mxu0 0.0
    %167 = vmatprep.subr.mxu0 0.0
    %168 = vmatpush1.msra.mxu0 0.0
    %169 = vmatprep.subr.mxu0 0.0
    %170 = vmatpush1.msra.mxu0 0.0
    %171 = vmatprep.subr.mxu0 0.0
    %172 = vmatpush1.msra.mxu0 0.0
    %173 = vmatprep.subr.mxu0 0.0
    %174 = vmatpush1.msra.mxu0 0.0
    %175 = vmatprep.subr.mxu0 0.0
    %176 = vmatpush1.msra.mxu0 0.0
    %177 = vmatprep.subr.mxu0 0.0
    %178 = vmatpush1.msra.mxu0 0.0
    %179 = vmatprep.subr.mxu0 0.0
    %180 = vmatpush1.msra.mxu0 0.0
    %181 = vmatprep.subr.mxu0 0.0
    %182 = vmatpush1.msra.mxu0 0.0
    %183 = vmatprep.subr.mxu0 0.0
    %184 = vmatpush1.msra.mxu0 0.0
    %185 = vmatprep.subr.mxu0 0.0
    %186 = vmatpush1.msra.mxu0 0.0
    %187 = vmatprep.subr.mxu0 0.0
    %188 = vmatpush1.msra.mxu0 0.0
    %189 = vmatprep.subr.mxu0 0.0
    %190 = vmatpush1.msra.mxu0 0.0
    %191 = vmatprep.subr.mxu0 0.0
    %192 = vmatpush1.msra.mxu0 0.0
    %193 = vmatprep.subr.mxu0 0.0
    %194 = vmatpush1.msra.mxu0 0.0
    %195 = vmatprep.subr.mxu0 0.0
    %196 = vmatpush1.msra.mxu0 0.0
    %197 = vmatprep.subr.mxu0 0.0
    %198 = vmatpush1.msra.mxu0 0.0
    %199 = vmatprep.subr.mxu0 0.0
    %200 = vmatpush1.msra.mxu0 0.0
    %201 = vmatprep.subr.mxu0 0.0
    %202 = vmatpush1.msra.mxu0 0.0
    %203 = vmatprep.mubr.f32.mxu0 0.0
    %204 = vmatmul.mubr.f32.gmra.mrb[0].mxu0 %v53
    %v205 = vpop.f32.mrb[0].mxu0
    %v206 = vadd.f32 %v49, %v205
    %v207 = vpop.f32.mrb[0].mxu0
    %v208 = vadd.f32 %v49, %v207
    %209 = vdwg.mxu0
    %v210 = vmax.f32 %v135, 0.0
    %v211 = vmax.f32 %v137, 0.0
    %v212 = vmax.f32 %v206, 0.0
    %v213 = vmax.f32 %v208, 0.0
    %v216 = vcombine.low %v210, %v211
    %v218 = vunpack.c.l.s4 1966171168
    %v219 = vunpack.c.0.s8 %v218
    %v220 = vlaneseq
    %v221 = vshrl.u32 %v220, 7
    %v222 = vsub.s32 %v219, %v221
    %v223 = vrot.slane %v216, %v222
    %v225 = vunpack.c.l.s4 1966171168
    %v226 = vunpack.c.0.s8 %v225
    %v227 = vlaneseq
    %v228 = vshrl.u32 %v227, 7
    %v229 = vsub.s32 %v226, %v228
    %v230 = vrot.slane %v223, %v229
    %v232 = vlaneseq
    %vm233 = vcmp.ge.s32.totalorder %v232, 0
    %vm234 = vcmp.lt.s32.totalorder %v232, 256
    %vm235 = vmand %vm233, %vm234
    %236 = vst.msk [vmem:[#allocation4] ss:$2 sm:$0x3] %vm235, %v230
    %v237 = vcombine.high %v223, %v223
    %v239 = vunpack.c.l.s4 1966171168
    %v240 = vunpack.c.0.s8 %v239
    %v241 = vlaneseq
    %v242 = vshrl.u32 %v241, 7
    %v243 = vsub.s32 %v240, %v242
    %v244 = vrot.slane %v237, %v243
    %s246 = scalar_lea.vmem [#allocation4], 4
    %247 = vst.msk [vmem:[%s246] ss:$2 sm:$0x3] %vm235, %v244
    %v248 = vcombine.high %v230, %v230
    %s250 = scalar_lea.vmem [#allocation4], 8
    %251 = vst.msk [vmem:[%s250] ss:$2 sm:$0x3] %vm235, %v248
    %v252 = vcombine.high %v244, %v244
    %s254 = scalar_lea.vmem [#allocation4], 12
    %255 = vst.msk [vmem:[%s254] ss:$2 sm:$0x3] %vm235, %v252
    %v256 = vcombine.high %v210, %v211
    %v258 = vunpack.c.l.s4 1966171168
    %v259 = vunpack.c.0.s8 %v258
    %v260 = vlaneseq
    %v261 = vshrl.u32 %v260, 7
    %v262 = vsub.s32 %v259, %v261
    %v263 = vrot.slane %v256, %v262
    %v265 = vunpack.c.l.s4 1966171168
    %v266 = vunpack.c.0.s8 %v265
    %v267 = vlaneseq
    %v268 = vshrl.u32 %v267, 7
    %v269 = vsub.s32 %v266, %v268
    %v270 = vrot.slane %v263, %v269
    %s272 = scalar_lea.vmem [#allocation4], 16
    %273 = vst.msk [vmem:[%s272] ss:$2 sm:$0x3] %vm235, %v270
    %v274 = vcombine.high %v263, %v263
    %v276 = vunpack.c.l.s4 1966171168
    %v277 = vunpack.c.0.s8 %v276
    %v278 = vlaneseq
    %v279 = vshrl.u32 %v278, 7
    %v280 = vsub.s32 %v277, %v279
    %v281 = vrot.slane %v274, %v280
    %s283 = scalar_lea.vmem [#allocation4], 20
    %284 = vst.msk [vmem:[%s283] ss:$2 sm:$0x3] %vm235, %v281
    %v285 = vcombine.high %v270, %v270
    %s287 = scalar_lea.vmem [#allocation4], 24
    %288 = vst.msk [vmem:[%s287] ss:$2 sm:$0x3] %vm235, %v285
    %v289 = vcombine.high %v281, %v281
    %s291 = scalar_lea.vmem [#allocation4], 28
    %292 = vst.msk [vmem:[%s291] ss:$2 sm:$0x3] %vm235, %v289
    %v295 = vcombine.low %v212, %v213
    %v297 = vunpack.c.l.s4 1966171168
    %v298 = vunpack.c.0.s8 %v297
    %v299 = vlaneseq
    %v300 = vshrl.u32 %v299, 7
    %v301 = vsub.s32 %v298, %v300
    %v302 = vrot.slane %v295, %v301
    %v304 = vunpack.c.l.s4 1966171168
    %v305 = vunpack.c.0.s8 %v304
    %v306 = vlaneseq
    %v307 = vshrl.u32 %v306, 7
    %v308 = vsub.s32 %v305, %v307
    %v309 = vrot.slane %v302, %v308
    %s311 = scalar_lea.vmem [#allocation4], 1
    %312 = vst.msk [vmem:[%s311] ss:$2 sm:$0x3] %vm235, %v309
    %v313 = vcombine.high %v302, %v302
    %v315 = vunpack.c.l.s4 1966171168
    %v316 = vunpack.c.0.s8 %v315
    %v317 = vlaneseq
    %v318 = vshrl.u32 %v317, 7
    %v319 = vsub.s32 %v316, %v318
    %v320 = vrot.slane %v313, %v319
    %s322 = scalar_lea.vmem [#allocation4], 5
    %323 = vst.msk [vmem:[%s322] ss:$2 sm:$0x3] %vm235, %v320
    %v324 = vcombine.high %v309, %v309
    %s326 = scalar_lea.vmem [#allocation4], 9
    %327 = vst.msk [vmem:[%s326] ss:$2 sm:$0x3] %vm235, %v324
    %v328 = vcombine.high %v320, %v320
    %s330 = scalar_lea.vmem [#allocation4], 13
    %331 = vst.msk [vmem:[%s330] ss:$2 sm:$0x3] %vm235, %v328
    %v332 = vcombine.high %v212, %v213
    %v334 = vunpack.c.l.s4 1966171168
    %v335 = vunpack.c.0.s8 %v334
    %v336 = vlaneseq
    %v337 = vshrl.u32 %v336, 7
    %v338 = vsub.s32 %v335, %v337
    %v339 = vrot.slane %v332, %v338
    %v341 = vunpack.c.l.s4 1966171168
    %v342 = vunpack.c.0.s8 %v341
    %v343 = vlaneseq
    %v344 = vshrl.u32 %v343, 7
    %v345 = vsub.s32 %v342, %v344
    %v346 = vrot.slane %v339, %v345
    %s348 = scalar_lea.vmem [#allocation4], 17
    %349 = vst.msk [vmem:[%s348] ss:$2 sm:$0x3] %vm235, %v346
    %v350 = vcombine.high %v339, %v339
    %v352 = vunpack.c.l.s4 1966171168
    %v353 = vunpack.c.0.s8 %v352
    %v354 = vlaneseq
    %v355 = vshrl.u32 %v354, 7
    %v356 = vsub.s32 %v353, %v355
    %v357 = vrot.slane %v350, %v356
    %s359 = scalar_lea.vmem [#allocation4], 21
    %360 = vst.msk [vmem:[%s359] ss:$2 sm:$0x3] %vm235, %v357
    %v361 = vcombine.high %v346, %v346
    %s363 = scalar_lea.vmem [#allocation4], 25
    %364 = vst.msk [vmem:[%s363] ss:$2 sm:$0x3] %vm235, %v361
    %v365 = vcombine.high %v357, %v357
    %s367 = scalar_lea.vmem [#allocation4], 29
    %368 = vst.msk [vmem:[%s367] ss:$2 sm:$0x3] %vm235, %v365
    %v369 = vld [vmem:[#allocation4] sm:$0xff]
    %v370 = vld [vmem:[#allocation4 + $0x8] sm:$0xff]
    %v371 = vld [vmem:[#allocation4 + $0x10] sm:$0xff]
    %v372 = vld [vmem:[#allocation4 + $0x18] sm:$0xff]
    %v373 = vld [vmem:[%s3] sm:$0xff]
    %v374 = vld [vmem:[%s3 + $0x8] sm:$0xff]
    %v375 = vld [vmem:[%s3 + $0x10] sm:$0xff]
    %v376 = vld [vmem:[%s3 + $0x18] sm:$0xff]
    %v377 = vld [vmem:[%s3 + $0x20] sm:$0xff]
    %v378 = vld [vmem:[%s3 + $0x28] sm:$0xff]
    %v379 = vld [vmem:[%s3 + $0x30] sm:$0xff]
    %v380 = vld [vmem:[%s3 + $0x38] sm:$0xff]
    %v381 = vld [vmem:[%s3 + $0x40] sm:$0xff]
    %v382 = vld [vmem:[%s3 + $0x48] sm:$0xff]
    %v383 = vld [vmem:[%s3 + $0x50] sm:$0xff]
    %v384 = vld [vmem:[%s3 + $0x58] sm:$0xff]
    %v385 = vld [vmem:[%s3 + $0x60] sm:$0xff]
    %v386 = vld [vmem:[%s3 + $0x68] sm:$0xff]
    %v387 = vld [vmem:[%s3 + $0x70] sm:$0xff]
    %v388 = vld [vmem:[%s3 + $0x78] sm:$0xff]
    %v389 = vld [vmem:[%s3 + $0x80] sm:$0xff]
    %v390 = vld [vmem:[%s3 + $0x88] sm:$0xff]
    %v391 = vld [vmem:[%s3 + $0x90] sm:$0xff]
    %v392 = vld [vmem:[%s3 + $0x98] sm:$0xff]
    %v393 = vld [vmem:[%s3 + $0xa0] sm:$0xff]
    %v394 = vld [vmem:[%s3 + $0xa8] sm:$0xff]
    %v395 = vld [vmem:[%s3 + $0xb0] sm:$0xff]
    %v396 = vld [vmem:[%s3 + $0xb8] sm:$0xff]
    %v397 = vld [vmem:[%s3 + $0xc0] sm:$0xff]
    %v398 = vld [vmem:[%s3 + $0xc8] sm:$0xff]
    %v399 = vld [vmem:[%s3 + $0xd0] sm:$0xff]
    %v400 = vld [vmem:[%s3 + $0xd8] sm:$0xff]
    %v401 = vld [vmem:[%s3 + $0xe0] sm:$0xff]
    %v402 = vld [vmem:[%s3 + $0xe8] sm:$0xff]
    %v403 = vld [vmem:[%s3 + $0xf0] sm:$0xff]
    %v404 = vld [vmem:[%s3 + $0xf8] sm:$0xff]
    %v405 = vld [vmem:[%s3 + $0x100] sm:$0xff]
    %v406 = vld [vmem:[%s3 + $0x108] sm:$0xff]
    %v407 = vld [vmem:[%s3 + $0x110] sm:$0xff]
    %v408 = vld [vmem:[%s3 + $0x118] sm:$0xff]
    %v409 = vld [vmem:[%s3 + $0x120] sm:$0xff]
    %v410 = vld [vmem:[%s3 + $0x128] sm:$0xff]
    %v411 = vld [vmem:[%s3 + $0x130] sm:$0xff]
    %v412 = vld [vmem:[%s3 + $0x138] sm:$0xff]
    %v413 = vld [vmem:[%s3 + $0x140] sm:$0xff]
    %v414 = vld [vmem:[%s3 + $0x148] sm:$0xff]
    %v415 = vld [vmem:[%s3 + $0x150] sm:$0xff]
    %v416 = vld [vmem:[%s3 + $0x158] sm:$0xff]
    %v417 = vld [vmem:[%s3 + $0x160] sm:$0xff]
    %v418 = vld [vmem:[%s3 + $0x168] sm:$0xff]
    %v419 = vld [vmem:[%s3 + $0x170] sm:$0xff]
    %v420 = vld [vmem:[%s3 + $0x178] sm:$0xff]
    %v421 = vld [vmem:[%s3 + $0x180] sm:$0xff]
    %v422 = vld [vmem:[%s3 + $0x188] sm:$0xff]
    %v423 = vld [vmem:[%s3 + $0x190] sm:$0xff]
    %v424 = vld [vmem:[%s3 + $0x198] sm:$0xff]
    %v425 = vld [vmem:[%s3 + $0x1a0] sm:$0xff]
    %v426 = vld [vmem:[%s3 + $0x1a8] sm:$0xff]
    %v427 = vld [vmem:[%s3 + $0x1b0] sm:$0xff]
    %v428 = vld [vmem:[%s3 + $0x1b8] sm:$0xff]
    %v429 = vld [vmem:[%s3 + $0x1c0] sm:$0xff]
    %v430 = vld [vmem:[%s3 + $0x1c8] sm:$0xff]
    %v431 = vld [vmem:[%s3 + $0x1d0] sm:$0xff]
    %v432 = vld [vmem:[%s3 + $0x1d8] sm:$0xff]
    %v433 = vld [vmem:[%s3 + $0x1e0] sm:$0xff]
    %v434 = vld [vmem:[%s3 + $0x1e8] sm:$0xff]
    %v435 = vld [vmem:[%s3 + $0x1f0] sm:$0xff]
    %v436 = vld [vmem:[%s3 + $0x1f8] sm:$0xff]
    %v437 = vld [vmem:[%s3 + $0x200] sm:$0xff]
    %v438 = vld [vmem:[%s3 + $0x208] sm:$0xff]
    %v439 = vld [vmem:[%s3 + $0x210] sm:$0xff]
    %v440 = vld [vmem:[%s3 + $0x218] sm:$0xff]
    %v441 = vld [vmem:[%s3 + $0x220] sm:$0xff]
    %v442 = vld [vmem:[%s3 + $0x228] sm:$0xff]
    %v443 = vld [vmem:[%s3 + $0x230] sm:$0xff]
    %v444 = vld [vmem:[%s3 + $0x238] sm:$0xff]
    %v445 = vld [vmem:[%s3 + $0x240] sm:$0xff]
    %v446 = vld [vmem:[%s3 + $0x248] sm:$0xff]
    %v447 = vld [vmem:[%s3 + $0x250] sm:$0xff]
    %v448 = vld [vmem:[%s3 + $0x258] sm:$0xff]
    %v449 = vld [vmem:[%s3 + $0x260] sm:$0xff]
    %v450 = vld [vmem:[%s3 + $0x268] sm:$0xff]
    %v451 = vld [vmem:[%s3 + $0x270] sm:$0xff]
    %v452 = vld [vmem:[%s3 + $0x278] sm:$0xff]
    %v453 = vld [vmem:[%s3 + $0x280] sm:$0xff]
    %v454 = vld [vmem:[%s3 + $0x288] sm:$0xff]
    %v455 = vld [vmem:[%s3 + $0x290] sm:$0xff]
    %v456 = vld [vmem:[%s3 + $0x298] sm:$0xff]
    %v457 = vld [vmem:[%s3 + $0x2a0] sm:$0xff]
    %v458 = vld [vmem:[%s3 + $0x2a8] sm:$0xff]
    %v459 = vld [vmem:[%s3 + $0x2b0] sm:$0xff]
    %v460 = vld [vmem:[%s3 + $0x2b8] sm:$0xff]
    %v461 = vld [vmem:[%s3 + $0x2c0] sm:$0xff]
    %v462 = vld [vmem:[%s3 + $0x2c8] sm:$0xff]
    %v463 = vld [vmem:[%s3 + $0x2d0] sm:$0xff]
    %v464 = vld [vmem:[%s3 + $0x2d8] sm:$0xff]
    %v465 = vld [vmem:[%s3 + $0x2e0] sm:$0xff]
    %v466 = vld [vmem:[%s3 + $0x2e8] sm:$0xff]
    %v467 = vld [vmem:[%s3 + $0x2f0] sm:$0xff]
    %v468 = vld [vmem:[%s3 + $0x2f8] sm:$0xff]
    %v469 = vld [vmem:[%s3 + $0x300] sm:$0xff]
    %v470 = vld [vmem:[%s3 + $0x308] sm:$0xff]
    %v471 = vld [vmem:[%s3 + $0x310] sm:$0xff]
    %v472 = vld [vmem:[%s3 + $0x318] sm:$0xff]
    %v473 = vld [vmem:[%s3 + $0x320] sm:$0xff]
    %v474 = vld [vmem:[%s3 + $0x328] sm:$0xff]
    %v475 = vld [vmem:[%s3 + $0x330] sm:$0xff]
    %v476 = vld [vmem:[%s3 + $0x338] sm:$0xff]
    %v477 = vld [vmem:[%s3 + $0x340] sm:$0xff]
    %v478 = vld [vmem:[%s3 + $0x348] sm:$0xff]
    %v479 = vld [vmem:[%s3 + $0x350] sm:$0xff]
    %v480 = vld [vmem:[%s3 + $0x358] sm:$0xff]
    %v481 = vld [vmem:[%s3 + $0x360] sm:$0xff]
    %v482 = vld [vmem:[%s3 + $0x368] sm:$0xff]
    %v483 = vld [vmem:[%s3 + $0x370] sm:$0xff]
    %v484 = vld [vmem:[%s3 + $0x378] sm:$0xff]
    %v485 = vld [vmem:[%s3 + $0x380] sm:$0xff]
    %v486 = vld [vmem:[%s3 + $0x388] sm:$0xff]
    %v487 = vld [vmem:[%s3 + $0x390] sm:$0xff]
    %v488 = vld [vmem:[%s3 + $0x398] sm:$0xff]
    %v489 = vld [vmem:[%s3 + $0x3a0] sm:$0xff]
    %v490 = vld [vmem:[%s3 + $0x3a8] sm:$0xff]
    %v491 = vld [vmem:[%s3 + $0x3b0] sm:$0xff]
    %v492 = vld [vmem:[%s3 + $0x3b8] sm:$0xff]
    %v493 = vld [vmem:[%s3 + $0x3c0] sm:$0xff]
    %v494 = vld [vmem:[%s3 + $0x3c8] sm:$0xff]
    %v495 = vld [vmem:[%s3 + $0x3d0] sm:$0xff]
    %v496 = vld [vmem:[%s3 + $0x3d8] sm:$0xff]
    %v497 = vld [vmem:[%s3 + $0x3e0] sm:$0xff]
    %v498 = vld [vmem:[%s3 + $0x3e8] sm:$0xff]
    %v499 = vld [vmem:[%s3 + $0x3f0] sm:$0xff]
    %v500 = vld [vmem:[%s3 + $0x3f8] sm:$0xff]
    %v501 = vld [vmem:[%s3 + $0x400] sm:$0xff]
    %v502 = vld [vmem:[%s3 + $0x408] sm:$0xff]
    %v503 = vld [vmem:[%s3 + $0x410] sm:$0xff]
    %v504 = vld [vmem:[%s3 + $0x418] sm:$0xff]
    %v505 = vld [vmem:[%s3 + $0x420] sm:$0xff]
    %v506 = vld [vmem:[%s3 + $0x428] sm:$0xff]
    %v507 = vld [vmem:[%s3 + $0x430] sm:$0xff]
    %v508 = vld [vmem:[%s3 + $0x438] sm:$0xff]
    %v509 = vld [vmem:[%s3 + $0x440] sm:$0xff]
    %v510 = vld [vmem:[%s3 + $0x448] sm:$0xff]
    %v511 = vld [vmem:[%s3 + $0x450] sm:$0xff]
    %v512 = vld [vmem:[%s3 + $0x458] sm:$0xff]
    %v513 = vld [vmem:[%s3 + $0x460] sm:$0xff]
    %v514 = vld [vmem:[%s3 + $0x468] sm:$0xff]
    %v515 = vld [vmem:[%s3 + $0x470] sm:$0xff]
    %v516 = vld [vmem:[%s3 + $0x478] sm:$0xff]
    %v517 = vld [vmem:[%s3 + $0x480] sm:$0xff]
    %v518 = vld [vmem:[%s3 + $0x488] sm:$0xff]
    %v519 = vld [vmem:[%s3 + $0x490] sm:$0xff]
    %v520 = vld [vmem:[%s3 + $0x498] sm:$0xff]
    %v521 = vld [vmem:[%s3 + $0x4a0] sm:$0xff]
    %v522 = vld [vmem:[%s3 + $0x4a8] sm:$0xff]
    %v523 = vld [vmem:[%s3 + $0x4b0] sm:$0xff]
    %v524 = vld [vmem:[%s3 + $0x4b8] sm:$0xff]
    %v525 = vld [vmem:[%s3 + $0x4c0] sm:$0xff]
    %v526 = vld [vmem:[%s3 + $0x4c8] sm:$0xff]
    %v527 = vld [vmem:[%s3 + $0x4d0] sm:$0xff]
    %v528 = vld [vmem:[%s3 + $0x4d8] sm:$0xff]
    %v529 = vld [vmem:[%s3 + $0x4e0] sm:$0xff]
    %v530 = vld [vmem:[%s3 + $0x4e8] sm:$0xff]
    %v531 = vld [vmem:[%s3 + $0x4f0] sm:$0xff]
    %v532 = vld [vmem:[%s3 + $0x4f8] sm:$0xff]
    %v533 = vld [vmem:[%s3 + $0x500] sm:$0xff]
    %v534 = vld [vmem:[%s3 + $0x508] sm:$0xff]
    %v535 = vld [vmem:[%s3 + $0x510] sm:$0xff]
    %v536 = vld [vmem:[%s3 + $0x518] sm:$0xff]
    %v537 = vld [vmem:[%s3 + $0x520] sm:$0xff]
    %v538 = vld [vmem:[%s3 + $0x528] sm:$0xff]
    %v539 = vld [vmem:[%s3 + $0x530] sm:$0xff]
    %v540 = vld [vmem:[%s3 + $0x538] sm:$0xff]
    %v541 = vld [vmem:[%s3 + $0x540] sm:$0xff]
    %v542 = vld [vmem:[%s3 + $0x548] sm:$0xff]
    %v543 = vld [vmem:[%s3 + $0x550] sm:$0xff]
    %v544 = vld [vmem:[%s3 + $0x558] sm:$0xff]
    %v545 = vld [vmem:[%s3 + $0x560] sm:$0xff]
    %v546 = vld [vmem:[%s3 + $0x568] sm:$0xff]
    %v547 = vld [vmem:[%s3 + $0x570] sm:$0xff]
    %v548 = vld [vmem:[%s3 + $0x578] sm:$0xff]
    %v549 = vld [vmem:[%s3 + $0x580] sm:$0xff]
    %v550 = vld [vmem:[%s3 + $0x588] sm:$0xff]
    %v551 = vld [vmem:[%s3 + $0x590] sm:$0xff]
    %v552 = vld [vmem:[%s3 + $0x598] sm:$0xff]
    %v553 = vld [vmem:[%s3 + $0x5a0] sm:$0xff]
    %v554 = vld [vmem:[%s3 + $0x5a8] sm:$0xff]
    %v555 = vld [vmem:[%s3 + $0x5b0] sm:$0xff]
    %v556 = vld [vmem:[%s3 + $0x5b8] sm:$0xff]
    %v557 = vld [vmem:[%s3 + $0x5c0] sm:$0xff]
    %v558 = vld [vmem:[%s3 + $0x5c8] sm:$0xff]
    %v559 = vld [vmem:[%s3 + $0x5d0] sm:$0xff]
    %v560 = vld [vmem:[%s3 + $0x5d8] sm:$0xff]
    %v561 = vld [vmem:[%s3 + $0x5e0] sm:$0xff]
    %v562 = vld [vmem:[%s3 + $0x5e8] sm:$0xff]
    %v563 = vld [vmem:[%s3 + $0x5f0] sm:$0xff]
    %v564 = vld [vmem:[%s3 + $0x5f8] sm:$0xff]
    %v565 = vld [vmem:[%s3 + $0x600] sm:$0xff]
    %v566 = vld [vmem:[%s3 + $0x608] sm:$0xff]
    %v567 = vld [vmem:[%s3 + $0x610] sm:$0xff]
    %v568 = vld [vmem:[%s3 + $0x618] sm:$0xff]
    %v569 = vld [vmem:[%s3 + $0x620] sm:$0xff]
    %v570 = vld [vmem:[%s3 + $0x628] sm:$0xff]
    %v571 = vld [vmem:[%s3 + $0x630] sm:$0xff]
    %v572 = vld [vmem:[%s3 + $0x638] sm:$0xff]
    %v573 = vld [vmem:[%s3 + $0x640] sm:$0xff]
    %v574 = vld [vmem:[%s3 + $0x648] sm:$0xff]
    %v575 = vld [vmem:[%s3 + $0x650] sm:$0xff]
    %v576 = vld [vmem:[%s3 + $0x658] sm:$0xff]
    %v577 = vld [vmem:[%s3 + $0x660] sm:$0xff]
    %v578 = vld [vmem:[%s3 + $0x668] sm:$0xff]
    %v579 = vld [vmem:[%s3 + $0x670] sm:$0xff]
    %v580 = vld [vmem:[%s3 + $0x678] sm:$0xff]
    %v581 = vld [vmem:[%s3 + $0x680] sm:$0xff]
    %v582 = vld [vmem:[%s3 + $0x688] sm:$0xff]
    %v583 = vld [vmem:[%s3 + $0x690] sm:$0xff]
    %v584 = vld [vmem:[%s3 + $0x698] sm:$0xff]
    %v585 = vld [vmem:[%s3 + $0x6a0] sm:$0xff]
    %v586 = vld [vmem:[%s3 + $0x6a8] sm:$0xff]
    %v587 = vld [vmem:[%s3 + $0x6b0] sm:$0xff]
    %v588 = vld [vmem:[%s3 + $0x6b8] sm:$0xff]
    %v589 = vld [vmem:[%s3 + $0x6c0] sm:$0xff]
    %v590 = vld [vmem:[%s3 + $0x6c8] sm:$0xff]
    %v591 = vld [vmem:[%s3 + $0x6d0] sm:$0xff]
    %v592 = vld [vmem:[%s3 + $0x6d8] sm:$0xff]
    %v593 = vld [vmem:[%s3 + $0x6e0] sm:$0xff]
    %v594 = vld [vmem:[%s3 + $0x6e8] sm:$0xff]
    %v595 = vld [vmem:[%s3 + $0x6f0] sm:$0xff]
    %v596 = vld [vmem:[%s3 + $0x6f8] sm:$0xff]
    %v597 = vld [vmem:[%s3 + $0x700] sm:$0xff]
    %v598 = vld [vmem:[%s3 + $0x708] sm:$0xff]
    %v599 = vld [vmem:[%s3 + $0x710] sm:$0xff]
    %v600 = vld [vmem:[%s3 + $0x718] sm:$0xff]
    %v601 = vld [vmem:[%s3 + $0x720] sm:$0xff]
    %v602 = vld [vmem:[%s3 + $0x728] sm:$0xff]
    %v603 = vld [vmem:[%s3 + $0x730] sm:$0xff]
    %v604 = vld [vmem:[%s3 + $0x738] sm:$0xff]
    %v605 = vld [vmem:[%s3 + $0x740] sm:$0xff]
    %v606 = vld [vmem:[%s3 + $0x748] sm:$0xff]
    %v607 = vld [vmem:[%s3 + $0x750] sm:$0xff]
    %v608 = vld [vmem:[%s3 + $0x758] sm:$0xff]
    %v609 = vld [vmem:[%s3 + $0x760] sm:$0xff]
    %v610 = vld [vmem:[%s3 + $0x768] sm:$0xff]
    %v611 = vld [vmem:[%s3 + $0x770] sm:$0xff]
    %v612 = vld [vmem:[%s3 + $0x778] sm:$0xff]
    %v613 = vld [vmem:[%s3 + $0x780] sm:$0xff]
    %v614 = vld [vmem:[%s3 + $0x788] sm:$0xff]
    %v615 = vld [vmem:[%s3 + $0x790] sm:$0xff]
    %v616 = vld [vmem:[%s3 + $0x798] sm:$0xff]
    %v617 = vld [vmem:[%s3 + $0x7a0] sm:$0xff]
    %v618 = vld [vmem:[%s3 + $0x7a8] sm:$0xff]
    %v619 = vld [vmem:[%s3 + $0x7b0] sm:$0xff]
    %v620 = vld [vmem:[%s3 + $0x7b8] sm:$0xff]
    %v621 = vld [vmem:[%s3 + $0x7c0] sm:$0xff]
    %v622 = vld [vmem:[%s3 + $0x7c8] sm:$0xff]
    %v623 = vld [vmem:[%s3 + $0x7d0] sm:$0xff]
    %v624 = vld [vmem:[%s3 + $0x7d8] sm:$0xff]
    %v625 = vld [vmem:[%s3 + $0x7e0] sm:$0xff]
    %v626 = vld [vmem:[%s3 + $0x7e8] sm:$0xff]
    %v627 = vld [vmem:[%s3 + $0x7f0] sm:$0xff]
    %v628 = vld [vmem:[%s3 + $0x7f8] sm:$0xff]
    %v629 = vld [vmem:[%s4] sm:$0x1]
    %v631 = vlaneseq
    %v632 = vshrl.u32 %v631, 7
    %v633 = vsub.s32 0, %v632
    %v634 = vrot.slane %v629, %v633
    %v640 = vcombine.high %v369, %v369
    %v642 = vunpack.c.l.s4 1983009808
    %v643 = vunpack.c.0.s8 %v642
    %v644 = vlaneseq
    %v645 = vshrl.u32 %v644, 7
    %v646 = vsub.s32 %v643, %v645
    %v647 = vrot.slane %v369, %v646
    %v649 = vunpack.c.l.s4 1983009808
    %v650 = vunpack.c.0.s8 %v649
    %v651 = vlaneseq
    %v652 = vshrl.u32 %v651, 7
    %v653 = vsub.s32 %v650, %v652
    %v654 = vrot.slane %v640, %v653
    %v655 = vcombine.high %v647, %v647
    %v656 = vcombine.high %v654, %v654
    %v657 = vcombine.high %v370, %v370
    %v659 = vunpack.c.l.s4 1983009808
    %v660 = vunpack.c.0.s8 %v659
    %v661 = vlaneseq
    %v662 = vshrl.u32 %v661, 7
    %v663 = vsub.s32 %v660, %v662
    %v664 = vrot.slane %v370, %v663
    %v666 = vunpack.c.l.s4 1983009808
    %v667 = vunpack.c.0.s8 %v666
    %v668 = vlaneseq
    %v669 = vshrl.u32 %v668, 7
    %v670 = vsub.s32 %v667, %v669
    %v671 = vrot.slane %v657, %v670
    %v672 = vcombine.high %v664, %v664
    %v673 = vcombine.high %v671, %v671
    %v674 = vcombine.high %v371, %v371
    %v676 = vunpack.c.l.s4 1983009808
    %v677 = vunpack.c.0.s8 %v676
    %v678 = vlaneseq
    %v679 = vshrl.u32 %v678, 7
    %v680 = vsub.s32 %v677, %v679
    %v681 = vrot.slane %v371, %v680
    %v683 = vunpack.c.l.s4 1983009808
    %v684 = vunpack.c.0.s8 %v683
    %v685 = vlaneseq
    %v686 = vshrl.u32 %v685, 7
    %v687 = vsub.s32 %v684, %v686
    %v688 = vrot.slane %v674, %v687
    %v689 = vcombine.high %v681, %v681
    %v690 = vcombine.high %v688, %v688
    %v691 = vcombine.high %v372, %v372
    %v693 = vunpack.c.l.s4 1983009808
    %v694 = vunpack.c.0.s8 %v693
    %v695 = vlaneseq
    %v696 = vshrl.u32 %v695, 7
    %v697 = vsub.s32 %v694, %v696
    %v698 = vrot.slane %v372, %v697
    %v700 = vunpack.c.l.s4 1983009808
    %v701 = vunpack.c.0.s8 %v700
    %v702 = vlaneseq
    %v703 = vshrl.u32 %v702, 7
    %v704 = vsub.s32 %v701, %v703
    %v705 = vrot.slane %v691, %v704
    %v706 = vcombine.high %v698, %v698
    %v707 = vcombine.high %v705, %v705
    %724 = vmatprep.subr.mxu0 0.0
    %725 = vmatpush1.msra.mxu0 %v373
    %726 = vmatprep.subr.mxu0 0.0
    %727 = vmatpush1.msra.mxu0 %v374
    %728 = vmatprep.subr.mxu0 0.0
    %729 = vmatpush1.msra.mxu0 %v375
    %730 = vmatprep.subr.mxu0 0.0
    %731 = vmatpush1.msra.mxu0 %v376
    %732 = vmatprep.subr.mxu0 0.0
    %733 = vmatpush1.msra.mxu0 %v377
    %734 = vmatprep.subr.mxu0 0.0
    %735 = vmatpush1.msra.mxu0 %v378
    %736 = vmatprep.subr.mxu0 0.0
    %737 = vmatpush1.msra.mxu0 %v379
    %738 = vmatprep.subr.mxu0 0.0
    %739 = vmatpush1.msra.mxu0 %v380
    %740 = vmatprep.subr.mxu0 0.0
    %741 = vmatpush1.msra.mxu0 %v381
    %742 = vmatprep.subr.mxu0 0.0
    %743 = vmatpush1.msra.mxu0 %v382
    %744 = vmatprep.subr.mxu0 0.0
    %745 = vmatpush1.msra.mxu0 %v383
    %746 = vmatprep.subr.mxu0 0.0
    %747 = vmatpush1.msra.mxu0 %v384
    %748 = vmatprep.subr.mxu0 0.0
    %749 = vmatpush1.msra.mxu0 %v385
    %750 = vmatprep.subr.mxu0 0.0
    %751 = vmatpush1.msra.mxu0 %v386
    %752 = vmatprep.subr.mxu0 0.0
    %753 = vmatpush1.msra.mxu0 %v387
    %754 = vmatprep.subr.mxu0 0.0
    %755 = vmatpush1.msra.mxu0 %v388
    %756 = vmatprep.subr.mxu0 0.0
    %757 = vmatpush1.msra.mxu0 %v389
    %758 = vmatprep.subr.mxu0 0.0
    %759 = vmatpush1.msra.mxu0 %v390
    %760 = vmatprep.subr.mxu0 0.0
    %761 = vmatpush1.msra.mxu0 %v391
    %762 = vmatprep.subr.mxu0 0.0
    %763 = vmatpush1.msra.mxu0 %v392
    %764 = vmatprep.subr.mxu0 0.0
    %765 = vmatpush1.msra.mxu0 %v393
    %766 = vmatprep.subr.mxu0 0.0
    %767 = vmatpush1.msra.mxu0 %v394
    %768 = vmatprep.subr.mxu0 0.0
    %769 = vmatpush1.msra.mxu0 %v395
    %770 = vmatprep.subr.mxu0 0.0
    %771 = vmatpush1.msra.mxu0 %v396
    %772 = vmatprep.subr.mxu0 0.0
    %773 = vmatpush1.msra.mxu0 %v397
    %774 = vmatprep.subr.mxu0 0.0
    %775 = vmatpush1.msra.mxu0 %v398
    %776 = vmatprep.subr.mxu0 0.0
    %777 = vmatpush1.msra.mxu0 %v399
    %778 = vmatprep.subr.mxu0 0.0
    %779 = vmatpush1.msra.mxu0 %v400
    %780 = vmatprep.subr.mxu0 0.0
    %781 = vmatpush1.msra.mxu0 %v401
    %782 = vmatprep.subr.mxu0 0.0
    %783 = vmatpush1.msra.mxu0 %v402
    %784 = vmatprep.subr.mxu0 0.0
    %785 = vmatpush1.msra.mxu0 %v403
    %786 = vmatprep.subr.mxu0 0.0
    %787 = vmatpush1.msra.mxu0 %v404
    %788 = vmatprep.mubr.f32.mxu0 %v655
    %789 = vmatmul.mubr.f32.gmra.mrb[0].mxu0 %v647
    %v790 = vpop.f32.mrb[0].mxu0
    %v791 = vadd.f32 %v634, %v790
    %v792 = vpop.f32.mrb[0].mxu0
    %793 = vdwg.mxu0
    %794 = vmatprep.subr.mxu0 0.0
    %795 = vmatpush1.msra.mxu0 %v405
    %796 = vmatprep.subr.mxu0 0.0
    %797 = vmatpush1.msra.mxu0 %v406
    %798 = vmatprep.subr.mxu0 0.0
    %799 = vmatpush1.msra.mxu0 %v407
    %800 = vmatprep.subr.mxu0 0.0
    %801 = vmatpush1.msra.mxu0 %v408
    %802 = vmatprep.subr.mxu0 0.0
    %803 = vmatpush1.msra.mxu0 %v409
    %804 = vmatprep.subr.mxu0 0.0
    %805 = vmatpush1.msra.mxu0 %v410
    %806 = vmatprep.subr.mxu0 0.0
    %807 = vmatpush1.msra.mxu0 %v411
    %808 = vmatprep.subr.mxu0 0.0
    %809 = vmatpush1.msra.mxu0 %v412
    %810 = vmatprep.subr.mxu0 0.0
    %811 = vmatpush1.msra.mxu0 %v413
    %812 = vmatprep.subr.mxu0 0.0
    %813 = vmatpush1.msra.mxu0 %v414
    %814 = vmatprep.subr.mxu0 0.0
    %815 = vmatpush1.msra.mxu0 %v415
    %816 = vmatprep.subr.mxu0 0.0
    %817 = vmatpush1.msra.mxu0 %v416
    %818 = vmatprep.subr.mxu0 0.0
    %819 = vmatpush1.msra.mxu0 %v417
    %820 = vmatprep.subr.mxu0 0.0
    %821 = vmatpush1.msra.mxu0 %v418
    %822 = vmatprep.subr.mxu0 0.0
    %823 = vmatpush1.msra.mxu0 %v419
    %824 = vmatprep.subr.mxu0 0.0
    %825 = vmatpush1.msra.mxu0 %v420
    %826 = vmatprep.subr.mxu0 0.0
    %827 = vmatpush1.msra.mxu0 %v421
    %828 = vmatprep.subr.mxu0 0.0
    %829 = vmatpush1.msra.mxu0 %v422
    %830 = vmatprep.subr.mxu0 0.0
    %831 = vmatpush1.msra.mxu0 %v423
    %832 = vmatprep.subr.mxu0 0.0
    %833 = vmatpush1.msra.mxu0 %v424
    %834 = vmatprep.subr.mxu0 0.0
    %835 = vmatpush1.msra.mxu0 %v425
    %836 = vmatprep.subr.mxu0 0.0
    %837 = vmatpush1.msra.mxu0 %v426
    %838 = vmatprep.subr.mxu0 0.0
    %839 = vmatpush1.msra.mxu0 %v427
    %840 = vmatprep.subr.mxu0 0.0
    %841 = vmatpush1.msra.mxu0 %v428
    %842 = vmatprep.subr.mxu0 0.0
    %843 = vmatpush1.msra.mxu0 %v429
    %844 = vmatprep.subr.mxu0 0.0
    %845 = vmatpush1.msra.mxu0 %v430
    %846 = vmatprep.subr.mxu0 0.0
    %847 = vmatpush1.msra.mxu0 %v431
    %848 = vmatprep.subr.mxu0 0.0
    %849 = vmatpush1.msra.mxu0 %v432
    %850 = vmatprep.subr.mxu0 0.0
    %851 = vmatpush1.msra.mxu0 %v433
    %852 = vmatprep.subr.mxu0 0.0
    %853 = vmatpush1.msra.mxu0 %v434
    %854 = vmatprep.subr.mxu0 0.0
    %855 = vmatpush1.msra.mxu0 %v435
    %856 = vmatprep.subr.mxu0 0.0
    %857 = vmatpush1.msra.mxu0 %v436
    %858 = vmatprep.mubr.f32.mxu0 %v656
    %859 = vmatmul.mubr.f32.gmra.mrb[0].mxu0 %v654
    %v860 = vpop.f32.mrb[0].mxu0
    %v861 = vadd.f32 %v791, %v860
    %v862 = vpop.f32.mrb[0].mxu0
    %863 = vdwg.mxu0
    %864 = vmatprep.subr.mxu0 0.0
    %865 = vmatpush1.msra.mxu0 %v437
    %866 = vmatprep.subr.mxu0 0.0
    %867 = vmatpush1.msra.mxu0 %v438
    %868 = vmatprep.subr.mxu0 0.0
    %869 = vmatpush1.msra.mxu0 %v439
    %870 = vmatprep.subr.mxu0 0.0
    %871 = vmatpush1.msra.mxu0 %v440
    %872 = vmatprep.subr.mxu0 0.0
    %873 = vmatpush1.msra.mxu0 %v441
    %874 = vmatprep.subr.mxu0 0.0
    %875 = vmatpush1.msra.mxu0 %v442
    %876 = vmatprep.subr.mxu0 0.0
    %877 = vmatpush1.msra.mxu0 %v443
    %878 = vmatprep.subr.mxu0 0.0
    %879 = vmatpush1.msra.mxu0 %v444
    %880 = vmatprep.subr.mxu0 0.0
    %881 = vmatpush1.msra.mxu0 %v445
    %882 = vmatprep.subr.mxu0 0.0
    %883 = vmatpush1.msra.mxu0 %v446
    %884 = vmatprep.subr.mxu0 0.0
    %885 = vmatpush1.msra.mxu0 %v447
    %886 = vmatprep.subr.mxu0 0.0
    %887 = vmatpush1.msra.mxu0 %v448
    %888 = vmatprep.subr.mxu0 0.0
    %889 = vmatpush1.msra.mxu0 %v449
    %890 = vmatprep.subr.mxu0 0.0
    %891 = vmatpush1.msra.mxu0 %v450
    %892 = vmatprep.subr.mxu0 0.0
    %893 = vmatpush1.msra.mxu0 %v451
    %894 = vmatprep.subr.mxu0 0.0
    %895 = vmatpush1.msra.mxu0 %v452
    %896 = vmatprep.subr.mxu0 0.0
    %897 = vmatpush1.msra.mxu0 %v453
    %898 = vmatprep.subr.mxu0 0.0
    %899 = vmatpush1.msra.mxu0 %v454
    %900 = vmatprep.subr.mxu0 0.0
    %901 = vmatpush1.msra.mxu0 %v455
    %902 = vmatprep.subr.mxu0 0.0
    %903 = vmatpush1.msra.mxu0 %v456
    %904 = vmatprep.subr.mxu0 0.0
    %905 = vmatpush1.msra.mxu0 %v457
    %906 = vmatprep.subr.mxu0 0.0
    %907 = vmatpush1.msra.mxu0 %v458
    %908 = vmatprep.subr.mxu0 0.0
    %909 = vmatpush1.msra.mxu0 %v459
    %910 = vmatprep.subr.mxu0 0.0
    %911 = vmatpush1.msra.mxu0 %v460
    %912 = vmatprep.subr.mxu0 0.0
    %913 = vmatpush1.msra.mxu0 %v461
    %914 = vmatprep.subr.mxu0 0.0
    %915 = vmatpush1.msra.mxu0 %v462
    %916 = vmatprep.subr.mxu0 0.0
    %917 = vmatpush1.msra.mxu0 %v463
    %918 = vmatprep.subr.mxu0 0.0
    %919 = vmatpush1.msra.mxu0 %v464
    %920 = vmatprep.subr.mxu0 0.0
    %921 = vmatpush1.msra.mxu0 %v465
    %922 = vmatprep.subr.mxu0 0.0
    %923 = vmatpush1.msra.mxu0 %v466
    %924 = vmatprep.subr.mxu0 0.0
    %925 = vmatpush1.msra.mxu0 %v467
    %926 = vmatprep.subr.mxu0 0.0
    %927 = vmatpush1.msra.mxu0 %v468
    %928 = vmatprep.mubr.f32.mxu0 %v672
    %929 = vmatmul.mubr.f32.gmra.mrb[0].mxu0 %v664
    %v930 = vpop.f32.mrb[0].mxu0
    %v931 = vadd.f32 %v861, %v930
    %v932 = vpop.f32.mrb[0].mxu0
    %933 = vdwg.mxu0
    %934 = vmatprep.subr.mxu0 0.0
    %935 = vmatpush1.msra.mxu0 %v469
    %936 = vmatprep.subr.mxu0 0.0
    %937 = vmatpush1.msra.mxu0 %v470
    %938 = vmatprep.subr.mxu0 0.0
    %939 = vmatpush1.msra.mxu0 %v471
    %940 = vmatprep.subr.mxu0 0.0
    %941 = vmatpush1.msra.mxu0 %v472
    %942 = vmatprep.subr.mxu0 0.0
    %943 = vmatpush1.msra.mxu0 %v473
    %944 = vmatprep.subr.mxu0 0.0
    %945 = vmatpush1.msra.mxu0 %v474
    %946 = vmatprep.subr.mxu0 0.0
    %947 = vmatpush1.msra.mxu0 %v475
    %948 = vmatprep.subr.mxu0 0.0
    %949 = vmatpush1.msra.mxu0 %v476
    %950 = vmatprep.subr.mxu0 0.0
    %951 = vmatpush1.msra.mxu0 %v477
    %952 = vmatprep.subr.mxu0 0.0
    %953 = vmatpush1.msra.mxu0 %v478
    %954 = vmatprep.subr.mxu0 0.0
    %955 = vmatpush1.msra.mxu0 %v479
    %956 = vmatprep.subr.mxu0 0.0
    %957 = vmatpush1.msra.mxu0 %v480
    %958 = vmatprep.subr.mxu0 0.0
    %959 = vmatpush1.msra.mxu0 %v481
    %960 = vmatprep.subr.mxu0 0.0
    %961 = vmatpush1.msra.mxu0 %v482
    %962 = vmatprep.subr.mxu0 0.0
    %963 = vmatpush1.msra.mxu0 %v483
    %964 = vmatprep.subr.mxu0 0.0
    %965 = vmatpush1.msra.mxu0 %v484
    %966 = vmatprep.subr.mxu0 0.0
    %967 = vmatpush1.msra.mxu0 %v485
    %968 = vmatprep.subr.mxu0 0.0
    %969 = vmatpush1.msra.mxu0 %v486
    %970 = vmatprep.subr.mxu0 0.0
    %971 = vmatpush1.msra.mxu0 %v487
    %972 = vmatprep.subr.mxu0 0.0
    %973 = vmatpush1.msra.mxu0 %v488
    %974 = vmatprep.subr.mxu0 0.0
    %975 = vmatpush1.msra.mxu0 %v489
    %976 = vmatprep.subr.mxu0 0.0
    %977 = vmatpush1.msra.mxu0 %v490
    %978 = vmatprep.subr.mxu0 0.0
    %979 = vmatpush1.msra.mxu0 %v491
    %980 = vmatprep.subr.mxu0 0.0
    %981 = vmatpush1.msra.mxu0 %v492
    %982 = vmatprep.subr.mxu0 0.0
    %983 = vmatpush1.msra.mxu0 %v493
    %984 = vmatprep.subr.mxu0 0.0
    %985 = vmatpush1.msra.mxu0 %v494
    %986 = vmatprep.subr.mxu0 0.0
    %987 = vmatpush1.msra.mxu0 %v495
    %988 = vmatprep.subr.mxu0 0.0
    %989 = vmatpush1.msra.mxu0 %v496
    %990 = vmatprep.subr.mxu0 0.0
    %991 = vmatpush1.msra.mxu0 %v497
    %992 = vmatprep.subr.mxu0 0.0
    %993 = vmatpush1.msra.mxu0 %v498
    %994 = vmatprep.subr.mxu0 0.0
    %995 = vmatpush1.msra.mxu0 %v499
    %996 = vmatprep.subr.mxu0 0.0
    %997 = vmatpush1.msra.mxu0 %v500
    %998 = vmatprep.mubr.f32.mxu0 %v673
    %999 = vmatmul.mubr.f32.gmra.mrb[0].mxu0 %v671
    %v1000 = vpop.f32.mrb[0].mxu0
    %v1001 = vadd.f32 %v931, %v1000
    %v1002 = vpop.f32.mrb[0].mxu0
    %1003 = vdwg.mxu0
    %1004 = vmatprep.subr.mxu0 0.0
    %1005 = vmatpush1.msra.mxu0 %v501
    %1006 = vmatprep.subr.mxu0 0.0
    %1007 = vmatpush1.msra.mxu0 %v502
    %1008 = vmatprep.subr.mxu0 0.0
    %1009 = vmatpush1.msra.mxu0 %v503
    %1010 = vmatprep.subr.mxu0 0.0
    %1011 = vmatpush1.msra.mxu0 %v504
    %1012 = vmatprep.subr.mxu0 0.0
    %1013 = vmatpush1.msra.mxu0 %v505
    %1014 = vmatprep.subr.mxu0 0.0
    %1015 = vmatpush1.msra.mxu0 %v506
    %1016 = vmatprep.subr.mxu0 0.0
    %1017 = vmatpush1.msra.mxu0 %v507
    %1018 = vmatprep.subr.mxu0 0.0
    %1019 = vmatpush1.msra.mxu0 %v508
    %1020 = vmatprep.subr.mxu0 0.0
    %1021 = vmatpush1.msra.mxu0 %v509
    %1022 = vmatprep.subr.mxu0 0.0
    %1023 = vmatpush1.msra.mxu0 %v510
    %1024 = vmatprep.subr.mxu0 0.0
    %1025 = vmatpush1.msra.mxu0 %v511
    %1026 = vmatprep.subr.mxu0 0.0
    %1027 = vmatpush1.msra.mxu0 %v512
    %1028 = vmatprep.subr.mxu0 0.0
    %1029 = vmatpush1.msra.mxu0 %v513
    %1030 = vmatprep.subr.mxu0 0.0
    %1031 = vmatpush1.msra.mxu0 %v514
    %1032 = vmatprep.subr.mxu0 0.0
    %1033 = vmatpush1.msra.mxu0 %v515
    %1034 = vmatprep.subr.mxu0 0.0
    %1035 = vmatpush1.msra.mxu0 %v516
    %1036 = vmatprep.subr.mxu0 0.0
    %1037 = vmatpush1.msra.mxu0 %v517
    %1038 = vmatprep.subr.mxu0 0.0
    %1039 = vmatpush1.msra.mxu0 %v518
    %1040 = vmatprep.subr.mxu0 0.0
    %1041 = vmatpush1.msra.mxu0 %v519
    %1042 = vmatprep.subr.mxu0 0.0
    %1043 = vmatpush1.msra.mxu0 %v520
    %1044 = vmatprep.subr.mxu0 0.0
    %1045 = vmatpush1.msra.mxu0 %v521
    %1046 = vmatprep.subr.mxu0 0.0
    %1047 = vmatpush1.msra.mxu0 %v522
    %1048 = vmatprep.subr.mxu0 0.0
    %1049 = vmatpush1.msra.mxu0 %v523
    %1050 = vmatprep.subr.mxu0 0.0
    %1051 = vmatpush1.msra.mxu0 %v524
    %1052 = vmatprep.subr.mxu0 0.0
    %1053 = vmatpush1.msra.mxu0 %v525
    %1054 = vmatprep.subr.mxu0 0.0
    %1055 = vmatpush1.msra.mxu0 %v526
    %1056 = vmatprep.subr.mxu0 0.0
    %1057 = vmatpush1.msra.mxu0 %v527
    %1058 = vmatprep.subr.mxu0 0.0
    %1059 = vmatpush1.msra.mxu0 %v528
    %1060 = vmatprep.subr.mxu0 0.0
    %1061 = vmatpush1.msra.mxu0 %v529
    %1062 = vmatprep.subr.mxu0 0.0
    %1063 = vmatpush1.msra.mxu0 %v530
    %1064 = vmatprep.subr.mxu0 0.0
    %1065 = vmatpush1.msra.mxu0 %v531
    %1066 = vmatprep.subr.mxu0 0.0
    %1067 = vmatpush1.msra.mxu0 %v532
    %1068 = vmatprep.mubr.f32.mxu0 %v689
    %1069 = vmatmul.mubr.f32.gmra.mrb[0].mxu0 %v681
    %v1070 = vpop.f32.mrb[0].mxu0
    %v1071 = vadd.f32 %v1001, %v1070
    %v1072 = vpop.f32.mrb[0].mxu0
    %1073 = vdwg.mxu0
    %1074 = vmatprep.subr.mxu0 0.0
    %1075 = vmatpush1.msra.mxu0 %v533
    %1076 = vmatprep.subr.mxu0 0.0
    %1077 = vmatpush1.msra.mxu0 %v534
    %1078 = vmatprep.subr.mxu0 0.0
    %1079 = vmatpush1.msra.mxu0 %v535
    %1080 = vmatprep.subr.mxu0 0.0
    %1081 = vmatpush1.msra.mxu0 %v536
    %1082 = vmatprep.subr.mxu0 0.0
    %1083 = vmatpush1.msra.mxu0 %v537
    %1084 = vmatprep.subr.mxu0 0.0
    %1085 = vmatpush1.msra.mxu0 %v538
    %1086 = vmatprep.subr.mxu0 0.0
    %1087 = vmatpush1.msra.mxu0 %v539
    %1088 = vmatprep.subr.mxu0 0.0
    %1089 = vmatpush1.msra.mxu0 %v540
    %1090 = vmatprep.subr.mxu0 0.0
    %1091 = vmatpush1.msra.mxu0 %v541
    %1092 = vmatprep.subr.mxu0 0.0
    %1093 = vmatpush1.msra.mxu0 %v542
    %1094 = vmatprep.subr.mxu0 0.0
    %1095 = vmatpush1.msra.mxu0 %v543
    %1096 = vmatprep.subr.mxu0 0.0
    %1097 = vmatpush1.msra.mxu0 %v544
    %1098 = vmatprep.subr.mxu0 0.0
    %1099 = vmatpush1.msra.mxu0 %v545
    %1100 = vmatprep.subr.mxu0 0.0
    %1101 = vmatpush1.msra.mxu0 %v546
    %1102 = vmatprep.subr.mxu0 0.0
    %1103 = vmatpush1.msra.mxu0 %v547
    %1104 = vmatprep.subr.mxu0 0.0
    %1105 = vmatpush1.msra.mxu0 %v548
    %1106 = vmatprep.subr.mxu0 0.0
    %1107 = vmatpush1.msra.mxu0 %v549
    %1108 = vmatprep.subr.mxu0 0.0
    %1109 = vmatpush1.msra.mxu0 %v550
    %1110 = vmatprep.subr.mxu0 0.0
    %1111 = vmatpush1.msra.mxu0 %v551
    %1112 = vmatprep.subr.mxu0 0.0
    %1113 = vmatpush1.msra.mxu0 %v552
    %1114 = vmatprep.subr.mxu0 0.0
    %1115 = vmatpush1.msra.mxu0 %v553
    %1116 = vmatprep.subr.mxu0 0.0
    %1117 = vmatpush1.msra.mxu0 %v554
    %1118 = vmatprep.subr.mxu0 0.0
    %1119 = vmatpush1.msra.mxu0 %v555
    %1120 = vmatprep.subr.mxu0 0.0
    %1121 = vmatpush1.msra.mxu0 %v556
    %1122 = vmatprep.subr.mxu0 0.0
    %1123 = vmatpush1.msra.mxu0 %v557
    %1124 = vmatprep.subr.mxu0 0.0
    %1125 = vmatpush1.msra.mxu0 %v558
    %1126 = vmatprep.subr.mxu0 0.0
    %1127 = vmatpush1.msra.mxu0 %v559
    %1128 = vmatprep.subr.mxu0 0.0
    %1129 = vmatpush1.msra.mxu0 %v560
    %1130 = vmatprep.subr.mxu0 0.0
    %1131 = vmatpush1.msra.mxu0 %v561
    %1132 = vmatprep.subr.mxu0 0.0
    %1133 = vmatpush1.msra.mxu0 %v562
    %1134 = vmatprep.subr.mxu0 0.0
    %1135 = vmatpush1.msra.mxu0 %v563
    %1136 = vmatprep.subr.mxu0 0.0
    %1137 = vmatpush1.msra.mxu0 %v564
    %1138 = vmatprep.mubr.f32.mxu0 %v690
    %1139 = vmatmul.mubr.f32.gmra.mrb[0].mxu0 %v688
    %v1140 = vpop.f32.mrb[0].mxu0
    %v1141 = vadd.f32 %v1071, %v1140
    %v1142 = vpop.f32.mrb[0].mxu0
    %1143 = vdwg.mxu0
    %1144 = vmatprep.subr.mxu0 0.0
    %1145 = vmatpush1.msra.mxu0 %v565
    %1146 = vmatprep.subr.mxu0 0.0
    %1147 = vmatpush1.msra.mxu0 %v566
    %1148 = vmatprep.subr.mxu0 0.0
    %1149 = vmatpush1.msra.mxu0 %v567
    %1150 = vmatprep.subr.mxu0 0.0
    %1151 = vmatpush1.msra.mxu0 %v568
    %1152 = vmatprep.subr.mxu0 0.0
    %1153 = vmatpush1.msra.mxu0 %v569
    %1154 = vmatprep.subr.mxu0 0.0
    %1155 = vmatpush1.msra.mxu0 %v570
    %1156 = vmatprep.subr.mxu0 0.0
    %1157 = vmatpush1.msra.mxu0 %v571
    %1158 = vmatprep.subr.mxu0 0.0
    %1159 = vmatpush1.msra.mxu0 %v572
    %1160 = vmatprep.subr.mxu0 0.0
    %1161 = vmatpush1.msra.mxu0 %v573
    %1162 = vmatprep.subr.mxu0 0.0
    %1163 = vmatpush1.msra.mxu0 %v574
    %1164 = vmatprep.subr.mxu0 0.0
    %1165 = vmatpush1.msra.mxu0 %v575
    %1166 = vmatprep.subr.mxu0 0.0
    %1167 = vmatpush1.msra.mxu0 %v576
    %1168 = vmatprep.subr.mxu0 0.0
    %1169 = vmatpush1.msra.mxu0 %v577
    %1170 = vmatprep.subr.mxu0 0.0
    %1171 = vmatpush1.msra.mxu0 %v578
    %1172 = vmatprep.subr.mxu0 0.0
    %1173 = vmatpush1.msra.mxu0 %v579
    %1174 = vmatprep.subr.mxu0 0.0
    %1175 = vmatpush1.msra.mxu0 %v580
    %1176 = vmatprep.subr.mxu0 0.0
    %1177 = vmatpush1.msra.mxu0 %v581
    %1178 = vmatprep.subr.mxu0 0.0
    %1179 = vmatpush1.msra.mxu0 %v582
    %1180 = vmatprep.subr.mxu0 0.0
    %1181 = vmatpush1.msra.mxu0 %v583
    %1182 = vmatprep.subr.mxu0 0.0
    %1183 = vmatpush1.msra.mxu0 %v584
    %1184 = vmatprep.subr.mxu0 0.0
    %1185 = vmatpush1.msra.mxu0 %v585
    %1186 = vmatprep.subr.mxu0 0.0
    %1187 = vmatpush1.msra.mxu0 %v586
    %1188 = vmatprep.subr.mxu0 0.0
    %1189 = vmatpush1.msra.mxu0 %v587
    %1190 = vmatprep.subr.mxu0 0.0
    %1191 = vmatpush1.msra.mxu0 %v588
    %1192 = vmatprep.subr.mxu0 0.0
    %1193 = vmatpush1.msra.mxu0 %v589
    %1194 = vmatprep.subr.mxu0 0.0
    %1195 = vmatpush1.msra.mxu0 %v590
    %1196 = vmatprep.subr.mxu0 0.0
    %1197 = vmatpush1.msra.mxu0 %v591
    %1198 = vmatprep.subr.mxu0 0.0
    %1199 = vmatpush1.msra.mxu0 %v592
    %1200 = vmatprep.subr.mxu0 0.0
    %1201 = vmatpush1.msra.mxu0 %v593
    %1202 = vmatprep.subr.mxu0 0.0
    %1203 = vmatpush1.msra.mxu0 %v594
    %1204 = vmatprep.subr.mxu0 0.0
    %1205 = vmatpush1.msra.mxu0 %v595
    %1206 = vmatprep.subr.mxu0 0.0
    %1207 = vmatpush1.msra.mxu0 %v596
    %1208 = vmatprep.mubr.f32.mxu0 %v706
    %1209 = vmatmul.mubr.f32.gmra.mrb[0].mxu0 %v698
    %v1210 = vpop.f32.mrb[0].mxu0
    %v1211 = vadd.f32 %v1141, %v1210
    %v1212 = vpop.f32.mrb[0].mxu0
    %1213 = vdwg.mxu0
    %1214 = vmatprep.subr.mxu0 0.0
    %1215 = vmatpush1.msra.mxu0 %v597
    %1216 = vmatprep.subr.mxu0 0.0
    %1217 = vmatpush1.msra.mxu0 %v598
    %1218 = vmatprep.subr.mxu0 0.0
    %1219 = vmatpush1.msra.mxu0 %v599
    %1220 = vmatprep.subr.mxu0 0.0
    %1221 = vmatpush1.msra.mxu0 %v600
    %1222 = vmatprep.subr.mxu0 0.0
    %1223 = vmatpush1.msra.mxu0 %v601
    %1224 = vmatprep.subr.mxu0 0.0
    %1225 = vmatpush1.msra.mxu0 %v602
    %1226 = vmatprep.subr.mxu0 0.0
    %1227 = vmatpush1.msra.mxu0 %v603
    %1228 = vmatprep.subr.mxu0 0.0
    %1229 = vmatpush1.msra.mxu0 %v604
    %1230 = vmatprep.subr.mxu0 0.0
    %1231 = vmatpush1.msra.mxu0 %v605
    %1232 = vmatprep.subr.mxu0 0.0
    %1233 = vmatpush1.msra.mxu0 %v606
    %1234 = vmatprep.subr.mxu0 0.0
    %1235 = vmatpush1.msra.mxu0 %v607
    %1236 = vmatprep.subr.mxu0 0.0
    %1237 = vmatpush1.msra.mxu0 %v608
    %1238 = vmatprep.subr.mxu0 0.0
    %1239 = vmatpush1.msra.mxu0 %v609
    %1240 = vmatprep.subr.mxu0 0.0
    %1241 = vmatpush1.msra.mxu0 %v610
    %1242 = vmatprep.subr.mxu0 0.0
    %1243 = vmatpush1.msra.mxu0 %v611
    %1244 = vmatprep.subr.mxu0 0.0
    %1245 = vmatpush1.msra.mxu0 %v612
    %1246 = vmatprep.subr.mxu0 0.0
    %1247 = vmatpush1.msra.mxu0 %v613
    %1248 = vmatprep.subr.mxu0 0.0
    %1249 = vmatpush1.msra.mxu0 %v614
    %1250 = vmatprep.subr.mxu0 0.0
    %1251 = vmatpush1.msra.mxu0 %v615
    %1252 = vmatprep.subr.mxu0 0.0
    %1253 = vmatpush1.msra.mxu0 %v616
    %1254 = vmatprep.subr.mxu0 0.0
    %1255 = vmatpush1.msra.mxu0 %v617
    %1256 = vmatprep.subr.mxu0 0.0
    %1257 = vmatpush1.msra.mxu0 %v618
    %1258 = vmatprep.subr.mxu0 0.0
    %1259 = vmatpush1.msra.mxu0 %v619
    %1260 = vmatprep.subr.mxu0 0.0
    %1261 = vmatpush1.msra.mxu0 %v620
    %1262 = vmatprep.subr.mxu0 0.0
    %1263 = vmatpush1.msra.mxu0 %v621
    %1264 = vmatprep.subr.mxu0 0.0
    %1265 = vmatpush1.msra.mxu0 %v622
    %1266 = vmatprep.subr.mxu0 0.0
    %1267 = vmatpush1.msra.mxu0 %v623
    %1268 = vmatprep.subr.mxu0 0.0
    %1269 = vmatpush1.msra.mxu0 %v624
    %1270 = vmatprep.subr.mxu0 0.0
    %1271 = vmatpush1.msra.mxu0 %v625
    %1272 = vmatprep.subr.mxu0 0.0
    %1273 = vmatpush1.msra.mxu0 %v626
    %1274 = vmatprep.subr.mxu0 0.0
    %1275 = vmatpush1.msra.mxu0 %v627
    %1276 = vmatprep.subr.mxu0 0.0
    %1277 = vmatpush1.msra.mxu0 %v628
    %1278 = vmatprep.mubr.f32.mxu0 %v707
    %1279 = vmatmul.mubr.f32.gmra.mrb[0].mxu0 %v705
    %v1280 = vpop.f32.mrb[0].mxu0
    %v1281 = vadd.f32 %v1211, %v1280
    %v1282 = vpop.f32.mrb[0].mxu0
    %1283 = vdwg.mxu0
    %1284 = vst [vmem:[#allocation2] sm:$0x3] %v1281
    // Predicated region
    $region22: #{wrapper_model_forward.1} parent=1 // pred_check
      _
    $region23: #{wrapper_model_forward.1} parent=1 // pred_check_branch
      %1286 = sbr.rel (0) target = $region25
    $region24: #{wrapper_model_forward.1} parent=1 // pred_region
      %s1288 = ssub.s32 32, 32
      %1289 = vsyncadd [#allocation3], %s1288
      %s1291 = sshll.u32 [#allocation2], 4
      %s1292 = int_to_ptr.vmem [resolvable:$true] %s1291
      %1294 = dma.vmem_to_hbm [thread:$0]  %s1292, 32, %s5, [#allocation3]
    $region25: #{wrapper_model_forward.1} parent=1 // pred_fallthru
      _
    // Predicated region
    $region26: #{wrapper_model_forward.1} parent=1 // pred_check
      _
    $region27: #{wrapper_model_forward.1} parent=1 // pred_check_branch
      %1296 = sbr.rel (0) target = $region29
    $region28: #{wrapper_model_forward.1} parent=1 // pred_region
      %s1298 = ssub.s32 512, 512
      %1299 = vsyncadd [#allocation5], %s1298
      %s1301 = sshll.u32 [#allocation4], 4
      %s1302 = int_to_ptr.vmem [resolvable:$true] %s1301
      %1304 = dma.vmem_to_hbm [thread:$0]  %s1302, 512, %s6, [#allocation5]
    $region29: #{wrapper_model_forward.1} parent=1 // pred_fallthru
      _
    // Predicated region
    $region30: #{wrapper_model_forward.1} parent=1 // pred_check
      _
    $region31: #{wrapper_model_forward.1} parent=1 // pred_check_branch
      %1306 = sbr.rel (0) target = $region33
    $region32: #{wrapper_model_forward.1} parent=1 // pred_region
      %1307 = dma.done [#allocation3], 32
    $region33: #{wrapper_model_forward.1} parent=1 // pred_fallthru
      _
    // Predicated region
    $region34: #{wrapper_model_forward.1} parent=1 // pred_check
      _
    $region35: #{wrapper_model_forward.1} parent=1 // pred_check_branch
      %1309 = sbr.rel (0) target = $region37
    $region36: #{wrapper_model_forward.1} parent=1 // pred_region
      %1310 = dma.done [#allocation5], 512
    $region37: #{wrapper_model_forward.1} parent=1 // pred_fallthru
      _
    %1311 = vsyncpa [#allocation3], 1
    %1312 = vsyncpa [#allocation5], 1

</llo_original>
